<compile_context>
chip_gen: v6e
topology: v6e:2x2x1
jax: 0.10.0
libtpu: 0.0.40
codegen_flags: <defaults>
</compile_context>

<pallas_src>
import functools

import jax
import jax.numpy as jnp
from jax.experimental import pallas as pl
from jax.experimental.pallas import tpu as pltpu


def _pondernet_kernel(x_ref, u_ref, wx_ref, wcat_ref, bias_ref, bhn_ref,
                      y_ref, p_ref, halt_ref, *, max_steps, n_hidden, sp):
    B = x_ref.shape[0]
    H = n_hidden
    SP = sp                    # lane-aligned segment pitch (multiple of 128)
    LCOL = 2 * SP              # lambda logit column (aligned)
    YCOL = 2 * SP + 1          # y logit column
    NOFF = 2 * SP + 128        # start of the n-gate segment (aligned)
    SIG_END = NOFF             # sigmoid covers [r | z | (lam, y, pad)] only

    f32 = jnp.float32

    # ---- hoisted, h-independent work ---------------------------------------
    x16 = x_ref[...].astype(jnp.bfloat16)
    w_cat = wcat_ref[...]                                # (H, F_pad) bf16, resident
    # gi = x @ [W_ir | W_iz | 0 | W_in] + [b_ir+b_hr | b_iz+b_hz | (b_l,b_y) | b_in]
    gi = (jnp.dot(x16, wx_ref[...], preferred_element_type=f32)
          + bias_ref[...])                               # (B, F_pad) f32
    gi_sig = gi[:, :SIG_END]                             # aligned prefix view
    gi_n = gi[:, NOFF:NOFF + H]                          # aligned view: W_in x + b_in
    bhn = bhn_ref[...]                                   # (1, H) hidden bias of n gate
    u = u_ref[...]                                       # (B, max_steps) uniforms
    lane = jax.lax.broadcasted_iota(jnp.int32, (B, max_steps), 1)

    h = jnp.zeros((B, H), f32)
    un = jnp.ones((B, 1), f32)                           # un-halted probability
    first = jnp.zeros((B, 1), jnp.int32)                 # 0 == not yet halted
    y_acc = jnp.zeros((B, max_steps), f32)
    p_acc = jnp.zeros((B, max_steps), f32)

    # Fully unrolled ponder loop: max_steps is a small static Python constant
    # (module default 20), so the scheduler sees the whole recurrence and all
    # slices / masks below are static.
    # TODO(synk): for very large max_steps switch to lax.fori_loop(unroll=4)
    # to bound register live ranges.
    for n in range(1, max_steps + 1):
        last = n == max_steps
        # One bf16 MXU pass per step: [gh_r | gh_z | (lam, y) | gh_n].
        pre = jnp.dot(h.astype(jnp.bfloat16), w_cat, preferred_element_type=f32)
        s_in = pre[:, :SIG_END] + gi_sig
        y_n = s_in[:, YCOL:YCOL + 1]                     # = h @ w_y + b_y
        if last:
            lam = jnp.ones((B, 1), f32)                  # lambda forced to 1
        else:
            sig = jax.nn.sigmoid(s_in)                   # r, z, lambda in one pass
            lam = sig[:, LCOL:LCOL + 1]

        m = lane == (n - 1)                              # static mask (unrolled n)
        y_acc = jnp.where(m, y_n, y_acc)
        p_acc = jnp.where(m, un * lam, p_acc)

        if last:
            first = jnp.where(first == 0, max_steps, first)
        else:
            # torch.bernoulli(lam) == (u < lam); halt at the first 1-draw.
            hit = u[:, n - 1:n] < lam
            first = jnp.where((first == 0) & hit, n, first)
            un = un * (1.0 - lam)
            # GRUCell update, PyTorch gate ordering (r, z, n).
            r = sig[:, 0:H]
            z = sig[:, SP:SP + H]
            g = jnp.tanh(gi_n + r * (pre[:, NOFF:NOFF + H] + bhn))
            h = (1.0 - z) * g + z * h

    # Lane-dense stores: one in-kernel transpose per output, no wrapper .T.
    y_ref[...] = y_acc.T
    p_ref[...] = p_acc.T
    halt_ref[...] = first


def pondernet_forward(x, params, u, *, max_steps, n_hidden):
    """PonderNet forward (allow_halting=False path).

    Returns (y, p, halting_step) with PyTorch shapes:
      y, p: (max_steps, batch) float32;  halting_step: (batch,) int32.
    `u` is a (batch, max_steps) tensor of uniforms in [0, 1) driving the
    Bernoulli halting draws (equivalent of torch.bernoulli(lambda_n)).
    """
    B, n_elems = x.shape
    H = n_hidden
    SP = -(-H // 128) * 128          # each weight segment padded to 128 lanes
    LCOL = 2 * SP
    YCOL = 2 * SP + 1
    NOFF = 2 * SP + 128
    F_pad = 3 * SP + 128
    f32 = jnp.float32

    wihT, whhT = params["wihT"], params["whhT"]          # (n_elems,3H), (H,3H)
    bih, bhh = params["bih"], params["bhh"]              # (1, 3H)

    # Fused, lane-aligned column layout: [ r | z | (lam, y, pad) | n ].
    wx = jnp.zeros((n_elems, F_pad), f32)
    wx = wx.at[:, 0:H].set(wihT[:, 0:H])
    wx = wx.at[:, SP:SP + H].set(wihT[:, H:2 * H])
    wx = wx.at[:, NOFF:NOFF + H].set(wihT[:, 2 * H:3 * H])

    wcat = jnp.zeros((H, F_pad), f32)
    wcat = wcat.at[:, 0:H].set(whhT[:, 0:H])
    wcat = wcat.at[:, SP:SP + H].set(whhT[:, H:2 * H])
    wcat = wcat.at[:, NOFF:NOFF + H].set(whhT[:, 2 * H:3 * H])
    wcat = wcat.at[:, LCOL:LCOL + 1].set(params["wl"])
    wcat = wcat.at[:, YCOL:YCOL + 1].set(params["wy"])

    # Biases that can ride the hoisted input term (kept exact in f32).
    bias = jnp.zeros((1, F_pad), f32)
    bias = bias.at[:, 0:H].set(bih[:, 0:H] + bhh[:, 0:H])
    bias = bias.at[:, SP:SP + H].set(bih[:, H:2 * H] + bhh[:, H:2 * H])
    bias = bias.at[:, LCOL:LCOL + 1].set(params["bl"])
    bias = bias.at[:, YCOL:YCOL + 1].set(params["by"])
    bias = bias.at[:, NOFF:NOFF + H].set(bih[:, 2 * H:3 * H])
    bhn = bhh[:, 2 * H:3 * H]        # must stay inside the r*(...) term

    # bf16 MXU operands (f32 accumulate); also halves weight VMEM on v7x.
    wx = wx.astype(jnp.bfloat16)
    wcat = wcat.astype(jnp.bfloat16)

    # Batch tile: >= 2 grid steps whenever the lane-dense (max_steps, bB)
    # output blocks allow it (bB must be a 128 multiple when splitting), so
    # v7x's two TensorCores both get work; 256 rows fill v6e's 2x256^2 MXU.
    if B % 512 == 0:
        bB = 256
    elif B % 256 == 0:
        bB = 128
    else:
        bB = B
    grid = (B // bB,)

    kernel = functools.partial(_pondernet_kernel, max_steps=max_steps,
                               n_hidden=H, sp=SP)

    y, p, halt = pl.pallas_call(
        kernel,
        grid=grid,
        in_specs=[
            pl.BlockSpec((bB, n_elems), lambda i: (i, 0)),      # x
            pl.BlockSpec((bB, max_steps), lambda i: (i, 0)),    # uniforms
            pl.BlockSpec((n_elems, F_pad), lambda i: (0, 0)),   # wx (bf16)
            pl.BlockSpec((H, F_pad), lambda i: (0, 0)),         # wcat (bf16)
            pl.BlockSpec((1, F_pad), lambda i: (0, 0)),         # fused biases
            pl.BlockSpec((1, H), lambda i: (0, 0)),             # b_hn
        ],
        out_specs=(
            pl.BlockSpec((max_steps, bB), lambda i: (0, i)),    # y (lane-dense)
            pl.BlockSpec((max_steps, bB), lambda i: (0, i)),    # p (lane-dense)
            pl.BlockSpec((bB, 1), lambda i: (i, 0)),            # halting step
        ),
        out_shape=(
            jax.ShapeDtypeStruct((max_steps, B), f32),
            jax.ShapeDtypeStruct((max_steps, B), f32),
            jax.ShapeDtypeStruct((B, 1), jnp.int32),
        ),
        compiler_params=pltpu.CompilerParams(
            dimension_semantics=("parallel",)),
    )(x, u, wx, wcat, bias, bhn)

    # TODO(synk): allow_halting=True early-break (dynamic #steps) is data
    # dependent and not expressible with static output shapes; the default
    # allow_halting=False path is implemented.
    return y, p, halt[:, 0]


def init_params(key, n_elems, n_hidden):
    """Deterministic init matching the PyTorch module's parameter shapes."""
    ks = jax.random.split(key, 8)
    s = 1.0 / float(jnp.sqrt(n_hidden))
    w_ih = jax.random.uniform(ks[0], (3 * n_hidden, n_elems), jnp.float32, -s, s)
    w_hh = jax.random.uniform(ks[1], (3 * n_hidden, n_hidden), jnp.float32, -s, s)
    b_ih = jax.random.uniform(ks[2], (3 * n_hidden,), jnp.float32, -s, s)
    b_hh = jax.random.uniform(ks[3], (3 * n_hidden,), jnp.float32, -s, s)
    w_y = jax.random.uniform(ks[4], (1, n_hidden), jnp.float32, -s, s)
    b_y = jax.random.uniform(ks[5], (1,), jnp.float32, -s, s)
    w_l = jax.random.uniform(ks[6], (1, n_hidden), jnp.float32, -s, s)
    b_l = jax.random.uniform(ks[7], (1,), jnp.float32, -s, s)
    return dict(
        wihT=jnp.asarray(w_ih.T), whhT=jnp.asarray(w_hh.T),
        bih=b_ih.reshape(1, -1), bhh=b_hh.reshape(1, -1),
        wy=jnp.asarray(w_y.T), by=b_y.reshape(1, 1),
        wl=jnp.asarray(w_l.T), bl=b_l.reshape(1, 1),
    )


def reference_forward(x, params, u, max_steps, n_hidden):
    """Pure-JAX reference mirroring the PyTorch loop (same uniforms u).

    Matmuls mirror the kernel's TPU numerics (bf16 operands, f32 accumulate);
    biases and all element-wise math stay in f32.
    """
    H = n_hidden
    B = x.shape[0]
    f32, bf16 = jnp.float32, jnp.bfloat16

    def mm(a, b):
        return jnp.dot(a.astype(bf16), b.astype(bf16), preferred_element_type=f32)

    h = jnp.zeros((B, H), f32)
    un = jnp.ones((B,), f32)
    ys, ps, lams = [], [], []
    gi = mm(x, params["wihT"]) + params["bih"][0]
    for n in range(1, max_steps + 1):
        if n == max_steps:
            lam = jnp.ones((B,), f32)
        else:
            lam = jax.nn.sigmoid(mm(h, params["wl"])[:, 0] + params["bl"][0, 0])
        ys.append(mm(h, params["wy"])[:, 0] + params["by"][0, 0])
        ps.append(un * lam)
        lams.append(lam)
        un = un * (1.0 - lam)
        gh = mm(h, params["whhT"]) + params["bhh"][0]
        r = jax.nn.sigmoid(gi[:, :H] + gh[:, :H])
        z = jax.nn.sigmoid(gi[:, H:2 * H] + gh[:, H:2 * H])
        g = jnp.tanh(gi[:, 2 * H:] + r * gh[:, 2 * H:])
        h = (1.0 - z) * g + z * h
    y = jnp.stack(ys)
    p = jnp.stack(ps)
    lam_all = jnp.stack(lams)                    # (max_steps, B)
    bern = u < lam_all.T                         # (B, max_steps)
    steps = jnp.arange(1, max_steps + 1)
    halting = jnp.min(jnp.where(bern, steps[None, :], max_steps), axis=1)
    return y, p, halting, lam_all


if __name__ == "__main__":
    BATCH, N_ELEMS, N_HIDDEN, MAX_STEPS = 8, 16, 32, 8

    key = jax.random.PRNGKey(0)
    k_x, k_p, k_u = jax.random.split(key, 3)
    x = jax.random.normal(k_x, (BATCH, N_ELEMS), jnp.float32)
    params = init_params(k_p, N_ELEMS, N_HIDDEN)
    u = jax.random.uniform(k_u, (BATCH, MAX_STEPS), jnp.float32)

    y, p, halting_step = pondernet_forward(
        x, params, u, max_steps=MAX_STEPS, n_hidden=N_HIDDEN)
    jax.block_until_ready((y, p, halting_step))

    y_ref, p_ref, halt_ref, lam_ref = reference_forward(
        x, params, u, MAX_STEPS, N_HIDDEN)

    assert y.shape == (MAX_STEPS, BATCH) and p.shape == (MAX_STEPS, BATCH)
    assert halting_step.shape == (BATCH,)
    assert jnp.allclose(y, y_ref, atol=1e-2), "y mismatch"
    assert jnp.allclose(p, p_ref, atol=1e-2), "p mismatch"
    # Halting probabilities sum to 1 per sample; halting step in [1, max_steps].
    assert jnp.allclose(p.sum(axis=0), 1.0, atol=1e-4)
    assert bool(jnp.all((halting_step >= 1) & (halting_step <= MAX_STEPS)))
    # Halting step must agree except where a uniform draw lands within fp
    # tolerance of lambda (kernel and reference may round differently there).
    close_call = jnp.any(jnp.abs(u - lam_ref.T) < 1e-2, axis=1)
    assert bool(jnp.all((halting_step == halt_ref) | close_call)), "halting mismatch"

    print("KERNEL_OK")
</pallas_src>

<mosaic_0001>
module attributes {stable_mosaic.version = 11 : i64} {
  func.func @_pondernet_kernel(%arg0: i32, %arg1: memref<8x16xf32, #tpu.memory_space<vmem>>, %arg2: memref<8x8xf32, #tpu.memory_space<vmem>>, %arg3: memref<16x512xbf16, #tpu.memory_space<vmem>>, %arg4: memref<32x512xbf16, #tpu.memory_space<vmem>>, %arg5: memref<1x512xf32, #tpu.memory_space<vmem>>, %arg6: memref<1x32xf32, #tpu.memory_space<vmem>>, %arg7: memref<8x8xf32, #tpu.memory_space<vmem>>, %arg8: memref<8x8xf32, #tpu.memory_space<vmem>>, %arg9: memref<8x1xi32, #tpu.memory_space<vmem>>) attributes {dimension_semantics = [#tpu.dimension_semantics<parallel>], iteration_bounds = array<i64: 1>, scalar_prefetch = 0 : i64, scratch_operands = 0 : i64, tpu.core_type = #tpu.core_type<tc>, window_params = [{transform_indices = @transform_0, window_bounds = array<i64: 8, 16>}, {transform_indices = @transform_1, window_bounds = array<i64: 8, 8>}, {pipeline_mode = #tpu.pipeline_mode<synchronous>, transform_indices = @transform_2, window_bounds = array<i64: 16, 512>}, {pipeline_mode = #tpu.pipeline_mode<synchronous>, transform_indices = @transform_3, window_bounds = array<i64: 32, 512>}, {pipeline_mode = #tpu.pipeline_mode<synchronous>, transform_indices = @transform_4, window_bounds = array<i64: 1, 512>}, {pipeline_mode = #tpu.pipeline_mode<synchronous>, transform_indices = @transform_5, window_bounds = array<i64: 1, 32>}, {transform_indices = @transform_6, window_bounds = array<i64: 8, 8>}, {transform_indices = @transform_7, window_bounds = array<i64: 8, 8>}, {transform_indices = @transform_8, window_bounds = array<i64: 8, 1>}]} {
    %c0 = arith.constant 0 : index
    %c0_0 = arith.constant 0 : index
    %0 = vector.load %arg1[%c0, %c0_0] : memref<8x16xf32, #tpu.memory_space<vmem>>, vector<8x16xf32>
    %1 = arith.truncf %0 : vector<8x16xf32> to vector<8x16xbf16>
    %c0_1 = arith.constant 0 : index
    %c0_2 = arith.constant 0 : index
    %2 = vector.load %arg4[%c0_1, %c0_2] : memref<32x512xbf16, #tpu.memory_space<vmem>>, vector<32x512xbf16>
    %c0_3 = arith.constant 0 : index
    %c0_4 = arith.constant 0 : index
    %3 = vector.load %arg3[%c0_3, %c0_4] : memref<16x512xbf16, #tpu.memory_space<vmem>>, vector<16x512xbf16>
    %cst = arith.constant dense<0.000000e+00> : vector<8x512xf32>
    %4 = tpu.matmul %1, %3, %cst {dimension_numbers = #tpu.dot_dimension_numbers<[1], [0], [0], [1], [0, 0, 1, 1], [], []>} : vector<8x16xbf16>, vector<16x512xbf16>, vector<8x512xf32> -> vector<8x512xf32>
    %c0_5 = arith.constant 0 : index
    %c0_6 = arith.constant 0 : index
    %5 = vector.load %arg5[%c0_5, %c0_6] : memref<1x512xf32, #tpu.memory_space<vmem>>, vector<1x512xf32>
    %6 = vector.broadcast %5 : vector<1x512xf32> to vector<8x512xf32>
    %7 = arith.addf %4, %6 : vector<8x512xf32>
    %8 = vector.extract_strided_slice %7 {offsets = [0, 0], sizes = [8, 384], strides = [1, 1]} : vector<8x512xf32> to vector<8x384xf32>
    %9 = vector.extract_strided_slice %7 {offsets = [0, 384], sizes = [8, 32], strides = [1, 1]} : vector<8x512xf32> to vector<8x32xf32>
    %c0_7 = arith.constant 0 : index
    %c0_8 = arith.constant 0 : index
    %10 = vector.load %arg6[%c0_7, %c0_8] : memref<1x32xf32, #tpu.memory_space<vmem>>, vector<1x32xf32>
    %c0_9 = arith.constant 0 : index
    %c0_10 = arith.constant 0 : index
    %11 = vector.load %arg2[%c0_9, %c0_10] : memref<8x8xf32, #tpu.memory_space<vmem>>, vector<8x8xf32>
    %12 = tpu.iota {dimensions = array<i32: 1>} : vector<8x8xi32>
    %cst_11 = arith.constant 0.000000e+00 : f32
    %13 = vector.broadcast %cst_11 : f32 to vector<8x32xf32>
    %cst_12 = arith.constant 1.000000e+00 : f32
    %14 = vector.broadcast %cst_12 : f32 to vector<8x1xf32>
    %c0_i32 = arith.constant 0 : i32
    %15 = vector.broadcast %c0_i32 : i32 to vector<8x1xi32>
    %cst_13 = arith.constant 0.000000e+00 : f32
    %16 = vector.broadcast %cst_13 : f32 to vector<8x8xf32>
    %cst_14 = arith.constant 0.000000e+00 : f32
    %17 = vector.broadcast %cst_14 : f32 to vector<8x8xf32>
    %18 = arith.truncf %13 : vector<8x32xf32> to vector<8x32xbf16>
    %cst_15 = arith.constant dense<0.000000e+00> : vector<8x512xf32>
    %19 = tpu.matmul %18, %2, %cst_15 {dimension_numbers = #tpu.dot_dimension_numbers<[1], [0], [0], [1], [0, 0, 1, 1], [], []>} : vector<8x32xbf16>, vector<32x512xbf16>, vector<8x512xf32> -> vector<8x512xf32>
    %20 = vector.extract_strided_slice %19 {offsets = [0, 0], sizes = [8, 384], strides = [1, 1]} : vector<8x512xf32> to vector<8x384xf32>
    %21 = arith.addf %20, %8 : vector<8x384xf32>
    %22 = vector.extract_strided_slice %21 {offsets = [0, 257], sizes = [8, 1], strides = [1, 1]} : vector<8x384xf32> to vector<8x1xf32>
    %23 = arith.negf %21 : vector<8x384xf32>
    %24 = math.exp %23 : vector<8x384xf32>
    %cst_16 = arith.constant 1.000000e+00 : f32
    %25 = vector.broadcast %cst_16 : f32 to vector<8x384xf32>
    %26 = arith.addf %25, %24 : vector<8x384xf32>
    %27 = arith.divf %25, %26 : vector<8x384xf32>
    %28 = vector.extract_strided_slice %27 {offsets = [0, 256], sizes = [8, 1], strides = [1, 1]} : vector<8x384xf32> to vector<8x1xf32>
    %c0_i32_17 = arith.constant 0 : i32
    %29 = vector.broadcast %c0_i32_17 : i32 to vector<8x8xi32>
    %30 = arith.cmpi eq, %12, %29 : vector<8x8xi32>
    %31 = vector.shape_cast %22 : vector<8x1xf32> to vector<8x1xf32>
    %32 = vector.broadcast %31 : vector<8x1xf32> to vector<8x8xf32>
    %33 = arith.select %30, %32, %16 : vector<8x8xi1>, vector<8x8xf32>
    %34 = arith.mulf %14, %28 : vector<8x1xf32>
    %35 = vector.shape_cast %34 : vector<8x1xf32> to vector<8x1xf32>
    %36 = vector.broadcast %35 : vector<8x1xf32> to vector<8x8xf32>
    %37 = arith.select %30, %36, %17 : vector<8x8xi1>, vector<8x8xf32>
    %38 = vector.extract_strided_slice %11 {offsets = [0, 0], sizes = [8, 1], strides = [1, 1]} : vector<8x8xf32> to vector<8x1xf32>
    %39 = arith.cmpf olt, %38, %28 : vector<8x1xf32>
    %c0_i32_18 = arith.constant 0 : i32
    %40 = vector.broadcast %c0_i32_18 : i32 to vector<8x1xi32>
    %41 = arith.cmpi eq, %15, %40 : vector<8x1xi32>
    %42 = arith.andi %41, %39 : vector<8x1xi1>
    %c1_i32 = arith.constant 1 : i32
    %43 = vector.broadcast %c1_i32 : i32 to vector<8x1xi32>
    %44 = arith.select %42, %43, %15 : vector<8x1xi1>, vector<8x1xi32>
    %cst_19 = arith.constant 1.000000e+00 : f32
    %45 = vector.broadcast %cst_19 : f32 to vector<8x1xf32>
    %46 = arith.subf %45, %28 : vector<8x1xf32>
    %47 = arith.mulf %14, %46 : vector<8x1xf32>
    %48 = vector.extract_strided_slice %27 {offsets = [0, 0], sizes = [8, 32], strides = [1, 1]} : vector<8x384xf32> to vector<8x32xf32>
    %49 = vector.extract_strided_slice %27 {offsets = [0, 128], sizes = [8, 32], strides = [1, 1]} : vector<8x384xf32> to vector<8x32xf32>
    %50 = vector.extract_strided_slice %19 {offsets = [0, 384], sizes = [8, 32], strides = [1, 1]} : vector<8x512xf32> to vector<8x32xf32>
    %51 = vector.broadcast %10 : vector<1x32xf32> to vector<8x32xf32>
    %52 = arith.addf %50, %51 : vector<8x32xf32>
    %53 = arith.mulf %48, %52 : vector<8x32xf32>
    %54 = arith.addf %9, %53 : vector<8x32xf32>
    %55 = math.tanh %54 : vector<8x32xf32>
    %cst_20 = arith.constant 1.000000e+00 : f32
    %56 = vector.broadcast %cst_20 : f32 to vector<8x32xf32>
    %57 = arith.subf %56, %49 : vector<8x32xf32>
    %58 = arith.mulf %57, %55 : vector<8x32xf32>
    %59 = arith.mulf %49, %13 : vector<8x32xf32>
    %60 = arith.addf %58, %59 : vector<8x32xf32>
    %61 = arith.truncf %60 : vector<8x32xf32> to vector<8x32xbf16>
    %cst_21 = arith.constant dense<0.000000e+00> : vector<8x512xf32>
    %62 = tpu.matmul %61, %2, %cst_21 {dimension_numbers = #tpu.dot_dimension_numbers<[1], [0], [0], [1], [0, 0, 1, 1], [], []>} : vector<8x32xbf16>, vector<32x512xbf16>, vector<8x512xf32> -> vector<8x512xf32>
    %63 = vector.extract_strided_slice %62 {offsets = [0, 0], sizes = [8, 384], strides = [1, 1]} : vector<8x512xf32> to vector<8x384xf32>
    %64 = arith.addf %63, %8 : vector<8x384xf32>
    %65 = vector.extract_strided_slice %64 {offsets = [0, 257], sizes = [8, 1], strides = [1, 1]} : vector<8x384xf32> to vector<8x1xf32>
    %66 = arith.negf %64 : vector<8x384xf32>
    %67 = math.exp %66 : vector<8x384xf32>
    %cst_22 = arith.constant 1.000000e+00 : f32
    %68 = vector.broadcast %cst_22 : f32 to vector<8x384xf32>
    %69 = arith.addf %68, %67 : vector<8x384xf32>
    %70 = arith.divf %68, %69 : vector<8x384xf32>
    %71 = vector.extract_strided_slice %70 {offsets = [0, 256], sizes = [8, 1], strides = [1, 1]} : vector<8x384xf32> to vector<8x1xf32>
    %c1_i32_23 = arith.constant 1 : i32
    %72 = vector.broadcast %c1_i32_23 : i32 to vector<8x8xi32>
    %73 = arith.cmpi eq, %12, %72 : vector<8x8xi32>
    %74 = vector.shape_cast %65 : vector<8x1xf32> to vector<8x1xf32>
    %75 = vector.broadcast %74 : vector<8x1xf32> to vector<8x8xf32>
    %76 = arith.select %73, %75, %33 : vector<8x8xi1>, vector<8x8xf32>
    %77 = arith.mulf %47, %71 : vector<8x1xf32>
    %78 = vector.shape_cast %77 : vector<8x1xf32> to vector<8x1xf32>
    %79 = vector.broadcast %78 : vector<8x1xf32> to vector<8x8xf32>
    %80 = arith.select %73, %79, %37 : vector<8x8xi1>, vector<8x8xf32>
    %81 = vector.extract_strided_slice %11 {offsets = [0, 1], sizes = [8, 1], strides = [1, 1]} : vector<8x8xf32> to vector<8x1xf32>
    %82 = arith.cmpf olt, %81, %71 : vector<8x1xf32>
    %c0_i32_24 = arith.constant 0 : i32
    %83 = vector.broadcast %c0_i32_24 : i32 to vector<8x1xi32>
    %84 = arith.cmpi eq, %44, %83 : vector<8x1xi32>
    %85 = arith.andi %84, %82 : vector<8x1xi1>
    %c2_i32 = arith.constant 2 : i32
    %86 = vector.broadcast %c2_i32 : i32 to vector<8x1xi32>
    %87 = arith.select %85, %86, %44 : vector<8x1xi1>, vector<8x1xi32>
    %cst_25 = arith.constant 1.000000e+00 : f32
    %88 = vector.broadcast %cst_25 : f32 to vector<8x1xf32>
    %89 = arith.subf %88, %71 : vector<8x1xf32>
    %90 = arith.mulf %47, %89 : vector<8x1xf32>
    %91 = vector.extract_strided_slice %70 {offsets = [0, 0], sizes = [8, 32], strides = [1, 1]} : vector<8x384xf32> to vector<8x32xf32>
    %92 = vector.extract_strided_slice %70 {offsets = [0, 128], sizes = [8, 32], strides = [1, 1]} : vector<8x384xf32> to vector<8x32xf32>
    %93 = vector.extract_strided_slice %62 {offsets = [0, 384], sizes = [8, 32], strides = [1, 1]} : vector<8x512xf32> to vector<8x32xf32>
    %94 = vector.broadcast %10 : vector<1x32xf32> to vector<8x32xf32>
    %95 = arith.addf %93, %94 : vector<8x32xf32>
    %96 = arith.mulf %91, %95 : vector<8x32xf32>
    %97 = arith.addf %9, %96 : vector<8x32xf32>
    %98 = math.tanh %97 : vector<8x32xf32>
    %cst_26 = arith.constant 1.000000e+00 : f32
    %99 = vector.broadcast %cst_26 : f32 to vector<8x32xf32>
    %100 = arith.subf %99, %92 : vector<8x32xf32>
    %101 = arith.mulf %100, %98 : vector<8x32xf32>
    %102 = arith.mulf %92, %60 : vector<8x32xf32>
    %103 = arith.addf %101, %102 : vector<8x32xf32>
    %104 = arith.truncf %103 : vector<8x32xf32> to vector<8x32xbf16>
    %cst_27 = arith.constant dense<0.000000e+00> : vector<8x512xf32>
    %105 = tpu.matmul %104, %2, %cst_27 {dimension_numbers = #tpu.dot_dimension_numbers<[1], [0], [0], [1], [0, 0, 1, 1], [], []>} : vector<8x32xbf16>, vector<32x512xbf16>, vector<8x512xf32> -> vector<8x512xf32>
    %106 = vector.extract_strided_slice %105 {offsets = [0, 0], sizes = [8, 384], strides = [1, 1]} : vector<8x512xf32> to vector<8x384xf32>
    %107 = arith.addf %106, %8 : vector<8x384xf32>
    %108 = vector.extract_strided_slice %107 {offsets = [0, 257], sizes = [8, 1], strides = [1, 1]} : vector<8x384xf32> to vector<8x1xf32>
    %109 = arith.negf %107 : vector<8x384xf32>
    %110 = math.exp %109 : vector<8x384xf32>
    %cst_28 = arith.constant 1.000000e+00 : f32
    %111 = vector.broadcast %cst_28 : f32 to vector<8x384xf32>
    %112 = arith.addf %111, %110 : vector<8x384xf32>
    %113 = arith.divf %111, %112 : vector<8x384xf32>
    %114 = vector.extract_strided_slice %113 {offsets = [0, 256], sizes = [8, 1], strides = [1, 1]} : vector<8x384xf32> to vector<8x1xf32>
    %c2_i32_29 = arith.constant 2 : i32
    %115 = vector.broadcast %c2_i32_29 : i32 to vector<8x8xi32>
    %116 = arith.cmpi eq, %12, %115 : vector<8x8xi32>
    %117 = vector.shape_cast %108 : vector<8x1xf32> to vector<8x1xf32>
    %118 = vector.broadcast %117 : vector<8x1xf32> to vector<8x8xf32>
    %119 = arith.select %116, %118, %76 : vector<8x8xi1>, vector<8x8xf32>
    %120 = arith.mulf %90, %114 : vector<8x1xf32>
    %121 = vector.shape_cast %120 : vector<8x1xf32> to vector<8x1xf32>
    %122 = vector.broadcast %121 : vector<8x1xf32> to vector<8x8xf32>
    %123 = arith.select %116, %122, %80 : vector<8x8xi1>, vector<8x8xf32>
    %124 = vector.extract_strided_slice %11 {offsets = [0, 2], sizes = [8, 1], strides = [1, 1]} : vector<8x8xf32> to vector<8x1xf32>
    %125 = arith.cmpf olt, %124, %114 : vector<8x1xf32>
    %c0_i32_30 = arith.constant 0 : i32
    %126 = vector.broadcast %c0_i32_30 : i32 to vector<8x1xi32>
    %127 = arith.cmpi eq, %87, %126 : vector<8x1xi32>
    %128 = arith.andi %127, %125 : vector<8x1xi1>
    %c3_i32 = arith.constant 3 : i32
    %129 = vector.broadcast %c3_i32 : i32 to vector<8x1xi32>
    %130 = arith.select %128, %129, %87 : vector<8x1xi1>, vector<8x1xi32>
    %cst_31 = arith.constant 1.000000e+00 : f32
    %131 = vector.broadcast %cst_31 : f32 to vector<8x1xf32>
    %132 = arith.subf %131, %114 : vector<8x1xf32>
    %133 = arith.mulf %90, %132 : vector<8x1xf32>
    %134 = vector.extract_strided_slice %113 {offsets = [0, 0], sizes = [8, 32], strides = [1, 1]} : vector<8x384xf32> to vector<8x32xf32>
    %135 = vector.extract_strided_slice %113 {offsets = [0, 128], sizes = [8, 32], strides = [1, 1]} : vector<8x384xf32> to vector<8x32xf32>
    %136 = vector.extract_strided_slice %105 {offsets = [0, 384], sizes = [8, 32], strides = [1, 1]} : vector<8x512xf32> to vector<8x32xf32>
    %137 = vector.broadcast %10 : vector<1x32xf32> to vector<8x32xf32>
    %138 = arith.addf %136, %137 : vector<8x32xf32>
    %139 = arith.mulf %134, %138 : vector<8x32xf32>
    %140 = arith.addf %9, %139 : vector<8x32xf32>
    %141 = math.tanh %140 : vector<8x32xf32>
    %cst_32 = arith.constant 1.000000e+00 : f32
    %142 = vector.broadcast %cst_32 : f32 to vector<8x32xf32>
    %143 = arith.subf %142, %135 : vector<8x32xf32>
    %144 = arith.mulf %143, %141 : vector<8x32xf32>
    %145 = arith.mulf %135, %103 : vector<8x32xf32>
    %146 = arith.addf %144, %145 : vector<8x32xf32>
    %147 = arith.truncf %146 : vector<8x32xf32> to vector<8x32xbf16>
    %cst_33 = arith.constant dense<0.000000e+00> : vector<8x512xf32>
    %148 = tpu.matmul %147, %2, %cst_33 {dimension_numbers = #tpu.dot_dimension_numbers<[1], [0], [0], [1], [0, 0, 1, 1], [], []>} : vector<8x32xbf16>, vector<32x512xbf16>, vector<8x512xf32> -> vector<8x512xf32>
    %149 = vector.extract_strided_slice %148 {offsets = [0, 0], sizes = [8, 384], strides = [1, 1]} : vector<8x512xf32> to vector<8x384xf32>
    %150 = arith.addf %149, %8 : vector<8x384xf32>
    %151 = vector.extract_strided_slice %150 {offsets = [0, 257], sizes = [8, 1], strides = [1, 1]} : vector<8x384xf32> to vector<8x1xf32>
    %152 = arith.negf %150 : vector<8x384xf32>
    %153 = math.exp %152 : vector<8x384xf32>
    %cst_34 = arith.constant 1.000000e+00 : f32
    %154 = vector.broadcast %cst_34 : f32 to vector<8x384xf32>
    %155 = arith.addf %154, %153 : vector<8x384xf32>
    %156 = arith.divf %154, %155 : vector<8x384xf32>
    %157 = vector.extract_strided_slice %156 {offsets = [0, 256], sizes = [8, 1], strides = [1, 1]} : vector<8x384xf32> to vector<8x1xf32>
    %c3_i32_35 = arith.constant 3 : i32
    %158 = vector.broadcast %c3_i32_35 : i32 to vector<8x8xi32>
    %159 = arith.cmpi eq, %12, %158 : vector<8x8xi32>
    %160 = vector.shape_cast %151 : vector<8x1xf32> to vector<8x1xf32>
    %161 = vector.broadcast %160 : vector<8x1xf32> to vector<8x8xf32>
    %162 = arith.select %159, %161, %119 : vector<8x8xi1>, vector<8x8xf32>
    %163 = arith.mulf %133, %157 : vector<8x1xf32>
    %164 = vector.shape_cast %163 : vector<8x1xf32> to vector<8x1xf32>
    %165 = vector.broadcast %164 : vector<8x1xf32> to vector<8x8xf32>
    %166 = arith.select %159, %165, %123 : vector<8x8xi1>, vector<8x8xf32>
    %167 = vector.extract_strided_slice %11 {offsets = [0, 3], sizes = [8, 1], strides = [1, 1]} : vector<8x8xf32> to vector<8x1xf32>
    %168 = arith.cmpf olt, %167, %157 : vector<8x1xf32>
    %c0_i32_36 = arith.constant 0 : i32
    %169 = vector.broadcast %c0_i32_36 : i32 to vector<8x1xi32>
    %170 = arith.cmpi eq, %130, %169 : vector<8x1xi32>
    %171 = arith.andi %170, %168 : vector<8x1xi1>
    %c4_i32 = arith.constant 4 : i32
    %172 = vector.broadcast %c4_i32 : i32 to vector<8x1xi32>
    %173 = arith.select %171, %172, %130 : vector<8x1xi1>, vector<8x1xi32>
    %cst_37 = arith.constant 1.000000e+00 : f32
    %174 = vector.broadcast %cst_37 : f32 to vector<8x1xf32>
    %175 = arith.subf %174, %157 : vector<8x1xf32>
    %176 = arith.mulf %133, %175 : vector<8x1xf32>
    %177 = vector.extract_strided_slice %156 {offsets = [0, 0], sizes = [8, 32], strides = [1, 1]} : vector<8x384xf32> to vector<8x32xf32>
    %178 = vector.extract_strided_slice %156 {offsets = [0, 128], sizes = [8, 32], strides = [1, 1]} : vector<8x384xf32> to vector<8x32xf32>
    %179 = vector.extract_strided_slice %148 {offsets = [0, 384], sizes = [8, 32], strides = [1, 1]} : vector<8x512xf32> to vector<8x32xf32>
    %180 = vector.broadcast %10 : vector<1x32xf32> to vector<8x32xf32>
    %181 = arith.addf %179, %180 : vector<8x32xf32>
    %182 = arith.mulf %177, %181 : vector<8x32xf32>
    %183 = arith.addf %9, %182 : vector<8x32xf32>
    %184 = math.tanh %183 : vector<8x32xf32>
    %cst_38 = arith.constant 1.000000e+00 : f32
    %185 = vector.broadcast %cst_38 : f32 to vector<8x32xf32>
    %186 = arith.subf %185, %178 : vector<8x32xf32>
    %187 = arith.mulf %186, %184 : vector<8x32xf32>
    %188 = arith.mulf %178, %146 : vector<8x32xf32>
    %189 = arith.addf %187, %188 : vector<8x32xf32>
    %190 = arith.truncf %189 : vector<8x32xf32> to vector<8x32xbf16>
    %cst_39 = arith.constant dense<0.000000e+00> : vector<8x512xf32>
    %191 = tpu.matmul %190, %2, %cst_39 {dimension_numbers = #tpu.dot_dimension_numbers<[1], [0], [0], [1], [0, 0, 1, 1], [], []>} : vector<8x32xbf16>, vector<32x512xbf16>, vector<8x512xf32> -> vector<8x512xf32>
    %192 = vector.extract_strided_slice %191 {offsets = [0, 0], sizes = [8, 384], strides = [1, 1]} : vector<8x512xf32> to vector<8x384xf32>
    %193 = arith.addf %192, %8 : vector<8x384xf32>
    %194 = vector.extract_strided_slice %193 {offsets = [0, 257], sizes = [8, 1], strides = [1, 1]} : vector<8x384xf32> to vector<8x1xf32>
    %195 = arith.negf %193 : vector<8x384xf32>
    %196 = math.exp %195 : vector<8x384xf32>
    %cst_40 = arith.constant 1.000000e+00 : f32
    %197 = vector.broadcast %cst_40 : f32 to vector<8x384xf32>
    %198 = arith.addf %197, %196 : vector<8x384xf32>
    %199 = arith.divf %197, %198 : vector<8x384xf32>
    %200 = vector.extract_strided_slice %199 {offsets = [0, 256], sizes = [8, 1], strides = [1, 1]} : vector<8x384xf32> to vector<8x1xf32>
    %c4_i32_41 = arith.constant 4 : i32
    %201 = vector.broadcast %c4_i32_41 : i32 to vector<8x8xi32>
    %202 = arith.cmpi eq, %12, %201 : vector<8x8xi32>
    %203 = vector.shape_cast %194 : vector<8x1xf32> to vector<8x1xf32>
    %204 = vector.broadcast %203 : vector<8x1xf32> to vector<8x8xf32>
    %205 = arith.select %202, %204, %162 : vector<8x8xi1>, vector<8x8xf32>
    %206 = arith.mulf %176, %200 : vector<8x1xf32>
    %207 = vector.shape_cast %206 : vector<8x1xf32> to vector<8x1xf32>
    %208 = vector.broadcast %207 : vector<8x1xf32> to vector<8x8xf32>
    %209 = arith.select %202, %208, %166 : vector<8x8xi1>, vector<8x8xf32>
    %210 = vector.extract_strided_slice %11 {offsets = [0, 4], sizes = [8, 1], strides = [1, 1]} : vector<8x8xf32> to vector<8x1xf32>
    %211 = arith.cmpf olt, %210, %200 : vector<8x1xf32>
    %c0_i32_42 = arith.constant 0 : i32
    %212 = vector.broadcast %c0_i32_42 : i32 to vector<8x1xi32>
    %213 = arith.cmpi eq, %173, %212 : vector<8x1xi32>
    %214 = arith.andi %213, %211 : vector<8x1xi1>
    %c5_i32 = arith.constant 5 : i32
    %215 = vector.broadcast %c5_i32 : i32 to vector<8x1xi32>
    %216 = arith.select %214, %215, %173 : vector<8x1xi1>, vector<8x1xi32>
    %cst_43 = arith.constant 1.000000e+00 : f32
    %217 = vector.broadcast %cst_43 : f32 to vector<8x1xf32>
    %218 = arith.subf %217, %200 : vector<8x1xf32>
    %219 = arith.mulf %176, %218 : vector<8x1xf32>
    %220 = vector.extract_strided_slice %199 {offsets = [0, 0], sizes = [8, 32], strides = [1, 1]} : vector<8x384xf32> to vector<8x32xf32>
    %221 = vector.extract_strided_slice %199 {offsets = [0, 128], sizes = [8, 32], strides = [1, 1]} : vector<8x384xf32> to vector<8x32xf32>
    %222 = vector.extract_strided_slice %191 {offsets = [0, 384], sizes = [8, 32], strides = [1, 1]} : vector<8x512xf32> to vector<8x32xf32>
    %223 = vector.broadcast %10 : vector<1x32xf32> to vector<8x32xf32>
    %224 = arith.addf %222, %223 : vector<8x32xf32>
    %225 = arith.mulf %220, %224 : vector<8x32xf32>
    %226 = arith.addf %9, %225 : vector<8x32xf32>
    %227 = math.tanh %226 : vector<8x32xf32>
    %cst_44 = arith.constant 1.000000e+00 : f32
    %228 = vector.broadcast %cst_44 : f32 to vector<8x32xf32>
    %229 = arith.subf %228, %221 : vector<8x32xf32>
    %230 = arith.mulf %229, %227 : vector<8x32xf32>
    %231 = arith.mulf %221, %189 : vector<8x32xf32>
    %232 = arith.addf %230, %231 : vector<8x32xf32>
    %233 = arith.truncf %232 : vector<8x32xf32> to vector<8x32xbf16>
    %cst_45 = arith.constant dense<0.000000e+00> : vector<8x512xf32>
    %234 = tpu.matmul %233, %2, %cst_45 {dimension_numbers = #tpu.dot_dimension_numbers<[1], [0], [0], [1], [0, 0, 1, 1], [], []>} : vector<8x32xbf16>, vector<32x512xbf16>, vector<8x512xf32> -> vector<8x512xf32>
    %235 = vector.extract_strided_slice %234 {offsets = [0, 0], sizes = [8, 384], strides = [1, 1]} : vector<8x512xf32> to vector<8x384xf32>
    %236 = arith.addf %235, %8 : vector<8x384xf32>
    %237 = vector.extract_strided_slice %236 {offsets = [0, 257], sizes = [8, 1], strides = [1, 1]} : vector<8x384xf32> to vector<8x1xf32>
    %238 = arith.negf %236 : vector<8x384xf32>
    %239 = math.exp %238 : vector<8x384xf32>
    %cst_46 = arith.constant 1.000000e+00 : f32
    %240 = vector.broadcast %cst_46 : f32 to vector<8x384xf32>
    %241 = arith.addf %240, %239 : vector<8x384xf32>
    %242 = arith.divf %240, %241 : vector<8x384xf32>
    %243 = vector.extract_strided_slice %242 {offsets = [0, 256], sizes = [8, 1], strides = [1, 1]} : vector<8x384xf32> to vector<8x1xf32>
    %c5_i32_47 = arith.constant 5 : i32
    %244 = vector.broadcast %c5_i32_47 : i32 to vector<8x8xi32>
    %245 = arith.cmpi eq, %12, %244 : vector<8x8xi32>
    %246 = vector.shape_cast %237 : vector<8x1xf32> to vector<8x1xf32>
    %247 = vector.broadcast %246 : vector<8x1xf32> to vector<8x8xf32>
    %248 = arith.select %245, %247, %205 : vector<8x8xi1>, vector<8x8xf32>
    %249 = arith.mulf %219, %243 : vector<8x1xf32>
    %250 = vector.shape_cast %249 : vector<8x1xf32> to vector<8x1xf32>
    %251 = vector.broadcast %250 : vector<8x1xf32> to vector<8x8xf32>
    %252 = arith.select %245, %251, %209 : vector<8x8xi1>, vector<8x8xf32>
    %253 = vector.extract_strided_slice %11 {offsets = [0, 5], sizes = [8, 1], strides = [1, 1]} : vector<8x8xf32> to vector<8x1xf32>
    %254 = arith.cmpf olt, %253, %243 : vector<8x1xf32>
    %c0_i32_48 = arith.constant 0 : i32
    %255 = vector.broadcast %c0_i32_48 : i32 to vector<8x1xi32>
    %256 = arith.cmpi eq, %216, %255 : vector<8x1xi32>
    %257 = arith.andi %256, %254 : vector<8x1xi1>
    %c6_i32 = arith.constant 6 : i32
    %258 = vector.broadcast %c6_i32 : i32 to vector<8x1xi32>
    %259 = arith.select %257, %258, %216 : vector<8x1xi1>, vector<8x1xi32>
    %cst_49 = arith.constant 1.000000e+00 : f32
    %260 = vector.broadcast %cst_49 : f32 to vector<8x1xf32>
    %261 = arith.subf %260, %243 : vector<8x1xf32>
    %262 = arith.mulf %219, %261 : vector<8x1xf32>
    %263 = vector.extract_strided_slice %242 {offsets = [0, 0], sizes = [8, 32], strides = [1, 1]} : vector<8x384xf32> to vector<8x32xf32>
    %264 = vector.extract_strided_slice %242 {offsets = [0, 128], sizes = [8, 32], strides = [1, 1]} : vector<8x384xf32> to vector<8x32xf32>
    %265 = vector.extract_strided_slice %234 {offsets = [0, 384], sizes = [8, 32], strides = [1, 1]} : vector<8x512xf32> to vector<8x32xf32>
    %266 = vector.broadcast %10 : vector<1x32xf32> to vector<8x32xf32>
    %267 = arith.addf %265, %266 : vector<8x32xf32>
    %268 = arith.mulf %263, %267 : vector<8x32xf32>
    %269 = arith.addf %9, %268 : vector<8x32xf32>
    %270 = math.tanh %269 : vector<8x32xf32>
    %cst_50 = arith.constant 1.000000e+00 : f32
    %271 = vector.broadcast %cst_50 : f32 to vector<8x32xf32>
    %272 = arith.subf %271, %264 : vector<8x32xf32>
    %273 = arith.mulf %272, %270 : vector<8x32xf32>
    %274 = arith.mulf %264, %232 : vector<8x32xf32>
    %275 = arith.addf %273, %274 : vector<8x32xf32>
    %276 = arith.truncf %275 : vector<8x32xf32> to vector<8x32xbf16>
    %cst_51 = arith.constant dense<0.000000e+00> : vector<8x512xf32>
    %277 = tpu.matmul %276, %2, %cst_51 {dimension_numbers = #tpu.dot_dimension_numbers<[1], [0], [0], [1], [0, 0, 1, 1], [], []>} : vector<8x32xbf16>, vector<32x512xbf16>, vector<8x512xf32> -> vector<8x512xf32>
    %278 = vector.extract_strided_slice %277 {offsets = [0, 0], sizes = [8, 384], strides = [1, 1]} : vector<8x512xf32> to vector<8x384xf32>
    %279 = arith.addf %278, %8 : vector<8x384xf32>
    %280 = vector.extract_strided_slice %279 {offsets = [0, 257], sizes = [8, 1], strides = [1, 1]} : vector<8x384xf32> to vector<8x1xf32>
    %281 = arith.negf %279 : vector<8x384xf32>
    %282 = math.exp %281 : vector<8x384xf32>
    %cst_52 = arith.constant 1.000000e+00 : f32
    %283 = vector.broadcast %cst_52 : f32 to vector<8x384xf32>
    %284 = arith.addf %283, %282 : vector<8x384xf32>
    %285 = arith.divf %283, %284 : vector<8x384xf32>
    %286 = vector.extract_strided_slice %285 {offsets = [0, 256], sizes = [8, 1], strides = [1, 1]} : vector<8x384xf32> to vector<8x1xf32>
    %c6_i32_53 = arith.constant 6 : i32
    %287 = vector.broadcast %c6_i32_53 : i32 to vector<8x8xi32>
    %288 = arith.cmpi eq, %12, %287 : vector<8x8xi32>
    %289 = vector.shape_cast %280 : vector<8x1xf32> to vector<8x1xf32>
    %290 = vector.broadcast %289 : vector<8x1xf32> to vector<8x8xf32>
    %291 = arith.select %288, %290, %248 : vector<8x8xi1>, vector<8x8xf32>
    %292 = arith.mulf %262, %286 : vector<8x1xf32>
    %293 = vector.shape_cast %292 : vector<8x1xf32> to vector<8x1xf32>
    %294 = vector.broadcast %293 : vector<8x1xf32> to vector<8x8xf32>
    %295 = arith.select %288, %294, %252 : vector<8x8xi1>, vector<8x8xf32>
    %296 = vector.extract_strided_slice %11 {offsets = [0, 6], sizes = [8, 1], strides = [1, 1]} : vector<8x8xf32> to vector<8x1xf32>
    %297 = arith.cmpf olt, %296, %286 : vector<8x1xf32>
    %c0_i32_54 = arith.constant 0 : i32
    %298 = vector.broadcast %c0_i32_54 : i32 to vector<8x1xi32>
    %299 = arith.cmpi eq, %259, %298 : vector<8x1xi32>
    %300 = arith.andi %299, %297 : vector<8x1xi1>
    %c7_i32 = arith.constant 7 : i32
    %301 = vector.broadcast %c7_i32 : i32 to vector<8x1xi32>
    %302 = arith.select %300, %301, %259 : vector<8x1xi1>, vector<8x1xi32>
    %cst_55 = arith.constant 1.000000e+00 : f32
    %303 = vector.broadcast %cst_55 : f32 to vector<8x1xf32>
    %304 = arith.subf %303, %286 : vector<8x1xf32>
    %305 = arith.mulf %262, %304 : vector<8x1xf32>
    %306 = vector.extract_strided_slice %285 {offsets = [0, 0], sizes = [8, 32], strides = [1, 1]} : vector<8x384xf32> to vector<8x32xf32>
    %307 = vector.extract_strided_slice %285 {offsets = [0, 128], sizes = [8, 32], strides = [1, 1]} : vector<8x384xf32> to vector<8x32xf32>
    %308 = vector.extract_strided_slice %277 {offsets = [0, 384], sizes = [8, 32], strides = [1, 1]} : vector<8x512xf32> to vector<8x32xf32>
    %309 = vector.broadcast %10 : vector<1x32xf32> to vector<8x32xf32>
    %310 = arith.addf %308, %309 : vector<8x32xf32>
    %311 = arith.mulf %306, %310 : vector<8x32xf32>
    %312 = arith.addf %9, %311 : vector<8x32xf32>
    %313 = math.tanh %312 : vector<8x32xf32>
    %cst_56 = arith.constant 1.000000e+00 : f32
    %314 = vector.broadcast %cst_56 : f32 to vector<8x32xf32>
    %315 = arith.subf %314, %307 : vector<8x32xf32>
    %316 = arith.mulf %315, %313 : vector<8x32xf32>
    %317 = arith.mulf %307, %275 : vector<8x32xf32>
    %318 = arith.addf %316, %317 : vector<8x32xf32>
    %319 = arith.truncf %318 : vector<8x32xf32> to vector<8x32xbf16>
    %cst_57 = arith.constant dense<0.000000e+00> : vector<8x512xf32>
    %320 = tpu.matmul %319, %2, %cst_57 {dimension_numbers = #tpu.dot_dimension_numbers<[1], [0], [0], [1], [0, 0, 1, 1], [], []>} : vector<8x32xbf16>, vector<32x512xbf16>, vector<8x512xf32> -> vector<8x512xf32>
    %321 = vector.extract_strided_slice %320 {offsets = [0, 0], sizes = [8, 384], strides = [1, 1]} : vector<8x512xf32> to vector<8x384xf32>
    %322 = arith.addf %321, %8 : vector<8x384xf32>
    %323 = vector.extract_strided_slice %322 {offsets = [0, 257], sizes = [8, 1], strides = [1, 1]} : vector<8x384xf32> to vector<8x1xf32>
    %cst_58 = arith.constant 1.000000e+00 : f32
    %324 = vector.broadcast %cst_58 : f32 to vector<8x1xf32>
    %c7_i32_59 = arith.constant 7 : i32
    %325 = vector.broadcast %c7_i32_59 : i32 to vector<8x8xi32>
    %326 = arith.cmpi eq, %12, %325 : vector<8x8xi32>
    %327 = vector.shape_cast %323 : vector<8x1xf32> to vector<8x1xf32>
    %328 = vector.broadcast %327 : vector<8x1xf32> to vector<8x8xf32>
    %329 = arith.select %326, %328, %291 : vector<8x8xi1>, vector<8x8xf32>
    %330 = arith.mulf %305, %324 : vector<8x1xf32>
    %331 = vector.shape_cast %330 : vector<8x1xf32> to vector<8x1xf32>
    %332 = vector.broadcast %331 : vector<8x1xf32> to vector<8x8xf32>
    %333 = arith.select %326, %332, %295 : vector<8x8xi1>, vector<8x8xf32>
    %c0_i32_60 = arith.constant 0 : i32
    %334 = vector.broadcast %c0_i32_60 : i32 to vector<8x1xi32>
    %335 = arith.cmpi eq, %302, %334 : vector<8x1xi32>
    %c8_i32 = arith.constant 8 : i32
    %336 = vector.broadcast %c8_i32 : i32 to vector<8x1xi32>
    %337 = arith.select %335, %336, %302 : vector<8x1xi1>, vector<8x1xi32>
    %338 = tpu.transpose %329, [1, 0] : vector<8x8xf32> -> vector<8x8xf32>
    %c0_61 = arith.constant 0 : index
    %c0_62 = arith.constant 0 : index
    %339 = vector.load %arg7[%c0_61, %c0_62] : memref<8x8xf32, #tpu.memory_space<vmem>>, vector<8x8xf32>
    tpu.vector_store %arg7[%c0_61, %c0_62], %338 {strides = array<i32>} : memref<8x8xf32, #tpu.memory_space<vmem>>, vector<8x8xf32>,
    %340 = tpu.transpose %333, [1, 0] : vector<8x8xf32> -> vector<8x8xf32>
    %c0_63 = arith.constant 0 : index
    %c0_64 = arith.constant 0 : index
    %341 = vector.load %arg8[%c0_63, %c0_64] : memref<8x8xf32, #tpu.memory_space<vmem>>, vector<8x8xf32>
    tpu.vector_store %arg8[%c0_63, %c0_64], %340 {strides = array<i32>} : memref<8x8xf32, #tpu.memory_space<vmem>>, vector<8x8xf32>,
    %c0_65 = arith.constant 0 : index
    %c0_66 = arith.constant 0 : index
    %342 = vector.load %arg9[%c0_65, %c0_66] : memref<8x1xi32, #tpu.memory_space<vmem>>, vector<8x1xi32>
    tpu.vector_store %arg9[%c0_65, %c0_66], %337 {strides = array<i32>} : memref<8x1xi32, #tpu.memory_space<vmem>>, vector<8x1xi32>,
    return
  }
  func.func @transform_0(%arg0: i32) -> (i32, i32) {
    %c0_i32 = arith.constant 0 : i32
    %c0_i32_0 = arith.constant 0 : i32
    return %arg0, %c0_i32 : i32, i32
  }
  func.func @transform_1(%arg0: i32) -> (i32, i32) {
    %c0_i32 = arith.constant 0 : i32
    %c0_i32_0 = arith.constant 0 : i32
    return %arg0, %c0_i32 : i32, i32
  }
  func.func @transform_2(%arg0: i32) -> (i32, i32) {
    %c0_i32 = arith.constant 0 : i32
    %c0_i32_0 = arith.constant 0 : i32
    %c0_i32_1 = arith.constant 0 : i32
    return %c0_i32, %c0_i32_0 : i32, i32
  }
  func.func @transform_3(%arg0: i32) -> (i32, i32) {
    %c0_i32 = arith.constant 0 : i32
    %c0_i32_0 = arith.constant 0 : i32
    %c0_i32_1 = arith.constant 0 : i32
    return %c0_i32, %c0_i32_0 : i32, i32
  }
  func.func @transform_4(%arg0: i32) -> (i32, i32) {
    %c0_i32 = arith.constant 0 : i32
    %c0_i32_0 = arith.constant 0 : i32
    %c0_i32_1 = arith.constant 0 : i32
    return %c0_i32, %c0_i32_0 : i32, i32
  }
  func.func @transform_5(%arg0: i32) -> (i32, i32) {
    %c0_i32 = arith.constant 0 : i32
    %c0_i32_0 = arith.constant 0 : i32
    %c0_i32_1 = arith.constant 0 : i32
    return %c0_i32, %c0_i32_0 : i32, i32
  }
  func.func @transform_6(%arg0: i32) -> (i32, i32) {
    %c0_i32 = arith.constant 0 : i32
    %c0_i32_0 = arith.constant 0 : i32
    return %c0_i32, %arg0 : i32, i32
  }
  func.func @transform_7(%arg0: i32) -> (i32, i32) {
    %c0_i32 = arith.constant 0 : i32
    %c0_i32_0 = arith.constant 0 : i32
    return %c0_i32, %arg0 : i32, i32
  }
  func.func @transform_8(%arg0: i32) -> (i32, i32) {
    %c0_i32 = arith.constant 0 : i32
    %c0_i32_0 = arith.constant 0 : i32
    return %arg0, %c0_i32 : i32, i32
  }
}

</mosaic_0001>

<llo_original>
// kernel: tpu_custom_call.1
$region0: #{tpu_custom_call.1}
  #allocation0 [shape = 'u32[]', space=smem, size = 0x4, offset = 0x4, fixed_abs, tag = 'smem constant byte address 0x4 - core index']
  #allocation1 [shape = 'u32[144,128]{1,0:T(1,128)}', space=vmem, size = 0x12000, scoped, tag = 'internal scratch']
  %s0 = inlined_call_operand.hbm [shape: f32[8,16], index: 0, kind: input, shape index: {}]
  %s1 = inlined_call_operand.hbm [shape: f32[8,8], index: 1, kind: input, shape index: {}]
  %s2 = inlined_call_operand.hbm [shape: bf16[16,512], index: 2, kind: input, shape index: {}]
  %s3 = inlined_call_operand.hbm [shape: bf16[32,512], index: 3, kind: input, shape index: {}]
  %s4 = inlined_call_operand.vmem [shape: f32[1,512], index: 4, kind: input, shape index: {}]
  %s5 = inlined_call_operand.vmem [shape: f32[1,32], index: 5, kind: input, shape index: {}]
  %s6 = inlined_call_operand.hbm [shape: f32[8,8], index: 6, kind: output, shape index: {0}]
  %s7 = inlined_call_operand.hbm [shape: f32[8,8], index: 7, kind: output, shape index: {1}]
  %s8 = inlined_call_operand.vmem [shape: s32[8,1], index: 8, kind: output, shape index: {2}]
  %9 = xla_tuple %s6, %s7, %s8
  %s10 = sld [smem:[#allocation0]]
  $region66: #{tpu_custom_call.1} parent=0
    _
  %s12 = ssub.s32 1, %s10
  %s13 = scalar_select 0, %s12, %s10
  $region1: #{tpu_custom_call.1} parent=0
    #allocation2 [shape = 'u8[4096]{0}', space=vmem, size = 0x1000, scoped, tag = 'input window, operand 0, single buffered']
    #allocation3 [shape = 's32[1]{0}', space=sflag, size = 0x4, scoped, tag = 'scoped memory for tpu_custom_call.1']
    #allocation4 [shape = 's32[1]{0}', space=sflag, size = 0x4, scoped, tag = 'scoped memory for tpu_custom_call.1']
    #allocation5 [shape = 'u8[4096]{0}', space=vmem, size = 0x1000, scoped, tag = 'input window, operand 1, single buffered']
    #allocation6 [shape = 's32[1]{0}', space=sflag, size = 0x4, scoped, tag = 'scoped memory for tpu_custom_call.1']
    #allocation7 [shape = 'u8[16384]{0}', space=vmem, size = 0x4000, scoped, tag = 'input window, operand 2, single buffered']
    #allocation8 [shape = 'u8[32768]{0}', space=vmem, size = 0x8000, scoped, tag = 'input window, operand 3, single buffered']
    #allocation9 [shape = 's32[1]{0}', space=sflag, size = 0x4, scoped, tag = 'scoped memory for tpu_custom_call.1']
    #allocation10 [shape = 'u8[4096]{0}', space=vmem, size = 0x1000, scoped, tag = 'output window, operand 0, single buffered']
    #allocation11 [shape = 'u8[4096]{0}', space=vmem, size = 0x1000, scoped, tag = 'output window, operand 1, single buffered']
    #allocation12 [shape = 's32[1]{0}', space=sflag, size = 0x4, scoped, tag = 'scoped memory for tpu_custom_call.1']
    %14 = vsyncpa [#allocation3], 0
    %15 = vsyncpa [#allocation6], 0
    %16 = vsyncpa [#allocation9], 0
    %17 = vsyncpa [#allocation4], 0
    %18 = vsyncpa [#allocation12], 0
    // Predicated region
    $region2: #{tpu_custom_call.1} parent=1 // pred_check
      _
    $region3: #{tpu_custom_call.1} parent=1 // pred_check_branch
      %20 = sbr.rel (0) target = $region5
    $region4: #{tpu_custom_call.1} parent=1 // pred_region
      %s22 = ssub.s32 128, 128
      %23 = vsyncadd [#allocation3], %s22
      %s25 = sshll.u32 [#allocation2], 4
      %s26 = int_to_ptr.vmem [resolvable:$true] %s25
      %28 = dma.hbm_to_vmem [thread:$0]  %s0, 128, %s26, [#allocation3]
    $region5: #{tpu_custom_call.1} parent=1 // pred_fallthru
      _
    // Predicated region
    $region6: #{tpu_custom_call.1} parent=1 // pred_check
      _
    $region7: #{tpu_custom_call.1} parent=1 // pred_check_branch
      %30 = sbr.rel (0) target = $region9
    $region8: #{tpu_custom_call.1} parent=1 // pred_region
      %s32 = ssub.s32 128, 128
      %33 = vsyncadd [#allocation6], %s32
      %s35 = sshll.u32 [#allocation5], 4
      %s36 = int_to_ptr.vmem [resolvable:$true] %s35
      %38 = dma.hbm_to_vmem [thread:$0]  %s1, 128, %s36, [#allocation6]
    $region9: #{tpu_custom_call.1} parent=1 // pred_fallthru
      _
    // Predicated region
    $region10: #{tpu_custom_call.1} parent=1 // pred_check
      _
    $region11: #{tpu_custom_call.1} parent=1 // pred_check_branch
      %40 = sbr.rel (0) target = $region13
    $region12: #{tpu_custom_call.1} parent=1 // pred_region
      %s42 = ssub.s32 512, 512
      %43 = vsyncadd [#allocation6], %s42
      %s44 = sshll.u32 [#allocation7], 4
      %s45 = int_to_ptr.vmem [resolvable:$true] %s44
      %50 = dma.hbm_to_vmem [thread:$0]  %s2, 512, %s45, [#allocation6], 256, 256, 16
    $region13: #{tpu_custom_call.1} parent=1 // pred_fallthru
      _
    // Predicated region
    $region14: #{tpu_custom_call.1} parent=1 // pred_check
      _
    $region15: #{tpu_custom_call.1} parent=1 // pred_check_branch
      %52 = sbr.rel (0) target = $region17
    $region16: #{tpu_custom_call.1} parent=1 // pred_region
      %s54 = ssub.s32 1024, 1024
      %55 = vsyncadd [#allocation9], %s54
      %s56 = sshll.u32 [#allocation8], 4
      %s57 = int_to_ptr.vmem [resolvable:$true] %s56
      %62 = dma.hbm_to_vmem [thread:$0]  %s3, 1024, %s57, [#allocation9], 256, 256, 16
    $region17: #{tpu_custom_call.1} parent=1 // pred_fallthru
      _
    // Predicated region
    $region18: #{tpu_custom_call.1} parent=1 // pred_check
      _
    $region19: #{tpu_custom_call.1} parent=1 // pred_check_branch
      %64 = sbr.rel (0) target = $region21
    $region20: #{tpu_custom_call.1} parent=1 // pred_region
      _
    $region21: #{tpu_custom_call.1} parent=1 // pred_fallthru
      _
    // Predicated region
    $region22: #{tpu_custom_call.1} parent=1 // pred_check
      _
    $region23: #{tpu_custom_call.1} parent=1 // pred_check_branch
      %66 = sbr.rel (0) target = $region25
    $region24: #{tpu_custom_call.1} parent=1 // pred_region
      _
    $region25: #{tpu_custom_call.1} parent=1 // pred_fallthru
      _
    // Predicated region
    $region26: #{tpu_custom_call.1} parent=1 // pred_check
      _
    $region27: #{tpu_custom_call.1} parent=1 // pred_check_branch
      %68 = sbr.rel (0) target = $region29
    $region28: #{tpu_custom_call.1} parent=1 // pred_region
      %69 = dma.done [#allocation3], 128
    $region29: #{tpu_custom_call.1} parent=1 // pred_fallthru
      _
    // Predicated region
    $region30: #{tpu_custom_call.1} parent=1 // pred_check
      _
    $region31: #{tpu_custom_call.1} parent=1 // pred_check_branch
      %71 = sbr.rel (0) target = $region33
    $region32: #{tpu_custom_call.1} parent=1 // pred_region
      %72 = dma.done [#allocation6], 128
    $region33: #{tpu_custom_call.1} parent=1 // pred_fallthru
      _
    // Predicated region
    $region34: #{tpu_custom_call.1} parent=1 // pred_check
      _
    $region35: #{tpu_custom_call.1} parent=1 // pred_check_branch
      %74 = sbr.rel (0) target = $region37
    $region36: #{tpu_custom_call.1} parent=1 // pred_region
      %75 = dma.done [#allocation6], 512
    $region37: #{tpu_custom_call.1} parent=1 // pred_fallthru
      _
    // Predicated region
    $region38: #{tpu_custom_call.1} parent=1 // pred_check
      _
    $region39: #{tpu_custom_call.1} parent=1 // pred_check_branch
      %77 = sbr.rel (0) target = $region41
    $region40: #{tpu_custom_call.1} parent=1 // pred_region
      %78 = dma.done [#allocation9], 1024
    $region41: #{tpu_custom_call.1} parent=1 // pred_fallthru
      _
    %v80 = vld [vmem:[#allocation2] sm:$0xff]
    %v81 = vpack.c.bf16 %v80, %v80
    %v82 = vld [vmem:[#allocation8] sm:$0xff]
    %v83 = vld [vmem:[#allocation8 + $0x8] sm:$0xff]
    %v84 = vld [vmem:[#allocation8 + $0x10] sm:$0xff]
    %v85 = vld [vmem:[#allocation8 + $0x18] sm:$0xff]
    %v86 = vld [vmem:[#allocation8 + $0x20] sm:$0xff]
    %v87 = vld [vmem:[#allocation8 + $0x28] sm:$0xff]
    %v88 = vld [vmem:[#allocation8 + $0x30] sm:$0xff]
    %v89 = vld [vmem:[#allocation8 + $0x38] sm:$0xff]
    %v90 = vld [vmem:[#allocation7] sm:$0xff]
    %v91 = vld [vmem:[#allocation7 + $0x8] sm:$0xff]
    %v92 = vld [vmem:[#allocation7 + $0x10] sm:$0xff]
    %v93 = vld [vmem:[#allocation7 + $0x18] sm:$0xff]
    %v94 = vld [vmem:[%s4] sm:$0xf]
    %v96 = vlaneseq
    %v97 = vshrl.u32 %v96, 7
    %v98 = vsub.s32 0, %v97
    %v99 = vrot.slane %v94, %v98
    %v100 = vlaneseq
    %v101 = vshrl.u32 %v100, 7
    %v102 = vsub.s32 1, %v101
    %v103 = vrot.slane %v94, %v102
    %v104 = vlaneseq
    %v105 = vshrl.u32 %v104, 7
    %v106 = vsub.s32 2, %v105
    %v107 = vrot.slane %v94, %v106
    %v108 = vlaneseq
    %v109 = vshrl.u32 %v108, 7
    %v110 = vsub.s32 3, %v109
    %v111 = vrot.slane %v94, %v110
    %v120 = vunpack.c.l.b16 %v90
    %v121 = vunpack.c.h.b16 %v90
    %v122 = vunpack.c.l.b16 %v91
    %v123 = vunpack.c.h.b16 %v91
    %v124 = vunpack.c.l.b16 %v92
    %v125 = vunpack.c.h.b16 %v92
    %v126 = vunpack.c.l.b16 %v93
    %v127 = vunpack.c.h.b16 %v93
    %v128 = vpack.c.b16 %v124, %v120
    %v129 = vpack.c.b16 %v125, %v121
    %v130 = vpack.c.b16 %v126, %v122
    %v131 = vpack.c.b16 %v127, %v123
    %vm136 = vcmask 130048
    %v138 = vsel %vm136, %v81, 0
    %140 = vmatprep.subr.bf16.mxu0 0
    %141 = vmatpush1.bf16.msra.mxu0 0
    %142 = vmatprep.subr.bf16.mxu0 0
    %143 = vmatpush1.bf16.msra.mxu0 0
    %144 = vmatprep.subr.bf16.mxu0 0
    %145 = vmatpush1.bf16.msra.mxu0 0
    %146 = vmatprep.subr.bf16.mxu0 0
    %147 = vmatpush1.bf16.msra.mxu0 0
    %148 = vmatprep.subr.bf16.mxu0 0
    %149 = vmatpush1.bf16.msra.mxu0 0
    %150 = vmatprep.subr.bf16.mxu0 0
    %151 = vmatpush1.bf16.msra.mxu0 0
    %152 = vmatprep.subr.bf16.mxu0 0
    %153 = vmatpush1.bf16.msra.mxu0 0
    %154 = vmatprep.subr.bf16.mxu0 %v129
    %155 = vmatpush1.bf16.msra.mxu0 %v128
    %156 = vmatprep.subr.bf16.mxu0 0
    %157 = vmatpush2.bf16.msra.mxu0 0
    %158 = vmatprep.subr.bf16.mxu0 0
    %159 = vmatpush2.bf16.msra.mxu0 0
    %160 = vmatprep.subr.bf16.mxu0 0
    %161 = vmatpush2.bf16.msra.mxu0 0
    %162 = vmatprep.subr.bf16.mxu0 0
    %163 = vmatpush2.bf16.msra.mxu0 0
    %164 = vmatprep.subr.bf16.mxu0 0
    %165 = vmatpush2.bf16.msra.mxu0 0
    %166 = vmatprep.subr.bf16.mxu0 0
    %167 = vmatpush2.bf16.msra.mxu0 0
    %168 = vmatprep.subr.bf16.mxu0 0
    %169 = vmatpush2.bf16.msra.mxu0 0
    %170 = vmatprep.subr.bf16.mxu0 0
    %171 = vmatpush2.bf16.msra.mxu0 0
    %172 = vmatprep.mubr.bf16.mxu0 0
    %173 = vmatmul.mubr.bf16.gmra.mxu0 %v138
    %v174 = vpop.f32.mrf.mxu0
    %v175 = vadd.f32 %v99, %v174
    %v176 = vpop.f32.mrf.mxu0
    %v177 = vadd.f32 %v103, %v176
    %v178 = vpop.f32.mrf.mxu0
    %v179 = vpop.f32.mrf.mxu0
    %180 = vdwg.mxu0
    %181 = vmatprep.subr.bf16.mxu0 0
    %182 = vmatpush1.bf16.msra.mxu0 0
    %183 = vmatprep.subr.bf16.mxu0 0
    %184 = vmatpush1.bf16.msra.mxu0 0
    %185 = vmatprep.subr.bf16.mxu0 0
    %186 = vmatpush1.bf16.msra.mxu0 0
    %187 = vmatprep.subr.bf16.mxu0 0
    %188 = vmatpush1.bf16.msra.mxu0 0
    %189 = vmatprep.subr.bf16.mxu0 0
    %190 = vmatpush1.bf16.msra.mxu0 0
    %191 = vmatprep.subr.bf16.mxu0 0
    %192 = vmatpush1.bf16.msra.mxu0 0
    %193 = vmatprep.subr.bf16.mxu0 0
    %194 = vmatpush1.bf16.msra.mxu0 0
    %195 = vmatprep.subr.bf16.mxu0 %v131
    %196 = vmatpush1.bf16.msra.mxu0 %v130
    %197 = vmatprep.subr.bf16.mxu0 0
    %198 = vmatpush2.bf16.msra.mxu0 0
    %199 = vmatprep.subr.bf16.mxu0 0
    %200 = vmatpush2.bf16.msra.mxu0 0
    %201 = vmatprep.subr.bf16.mxu0 0
    %202 = vmatpush2.bf16.msra.mxu0 0
    %203 = vmatprep.subr.bf16.mxu0 0
    %204 = vmatpush2.bf16.msra.mxu0 0
    %205 = vmatprep.subr.bf16.mxu0 0
    %206 = vmatpush2.bf16.msra.mxu0 0
    %207 = vmatprep.subr.bf16.mxu0 0
    %208 = vmatpush2.bf16.msra.mxu0 0
    %209 = vmatprep.subr.bf16.mxu0 0
    %210 = vmatpush2.bf16.msra.mxu0 0
    %211 = vmatprep.subr.bf16.mxu0 0
    %212 = vmatpush2.bf16.msra.mxu0 0
    %213 = vmatprep.mubr.bf16.mxu0 0
    %214 = vmatmul.mubr.bf16.gmra.mxu0 %v138
    %v215 = vpop.f32.mrf.mxu0
    %v216 = vadd.f32 %v107, %v215
    %v217 = vpop.f32.mrf.mxu0
    %v218 = vadd.f32 %v111, %v217
    %v219 = vpop.f32.mrf.mxu0
    %v220 = vpop.f32.mrf.mxu0
    %221 = vdwg.mxu0
    %v222 = vld [vmem:[%s5] sm:$0x1]
    %v223 = vld [vmem:[#allocation5] sm:$0xff]
    %v224 = vlaneseq
    %v225 = vand.u32 %v224, 127
    %v234 = vunpack.c.l.b16 %v82
    %v235 = vunpack.c.h.b16 %v82
    %v236 = vunpack.c.l.b16 %v83
    %v237 = vunpack.c.h.b16 %v83
    %v238 = vunpack.c.l.b16 %v84
    %v239 = vunpack.c.h.b16 %v84
    %v240 = vunpack.c.l.b16 %v85
    %v241 = vunpack.c.h.b16 %v85
    %v242 = vunpack.c.l.b16 %v86
    %v243 = vunpack.c.h.b16 %v86
    %v244 = vunpack.c.l.b16 %v87
    %v245 = vunpack.c.h.b16 %v87
    %v246 = vunpack.c.l.b16 %v88
    %v247 = vunpack.c.h.b16 %v88
    %v248 = vunpack.c.l.b16 %v89
    %v249 = vunpack.c.h.b16 %v89
    %v250 = vpack.c.b16 %v238, %v234
    %v251 = vpack.c.b16 %v239, %v235
    %v252 = vpack.c.b16 %v240, %v236
    %v253 = vpack.c.b16 %v241, %v237
    %v254 = vpack.c.b16 %v246, %v242
    %v255 = vpack.c.b16 %v247, %v243
    %v256 = vpack.c.b16 %v248, %v244
    %v257 = vpack.c.b16 %v249, %v245
    %vm266 = vcmask 261120
    %v268 = vsel %vm266, 0, 0
    %270 = vmatprep.subr.bf16.mxu0 0
    %271 = vmatpush1.bf16.msra.mxu0 0
    %272 = vmatprep.subr.bf16.mxu0 0
    %273 = vmatpush1.bf16.msra.mxu0 0
    %274 = vmatprep.subr.bf16.mxu0 0
    %275 = vmatpush1.bf16.msra.mxu0 0
    %276 = vmatprep.subr.bf16.mxu0 0
    %277 = vmatpush1.bf16.msra.mxu0 0
    %278 = vmatprep.subr.bf16.mxu0 0
    %279 = vmatpush1.bf16.msra.mxu0 0
    %280 = vmatprep.subr.bf16.mxu0 0
    %281 = vmatpush1.bf16.msra.mxu0 0
    %282 = vmatprep.subr.bf16.mxu0 %v255
    %283 = vmatpush1.bf16.msra.mxu0 %v254
    %284 = vmatprep.subr.bf16.mxu0 %v251
    %285 = vmatpush1.bf16.msra.mxu0 %v250
    %286 = vmatprep.subr.bf16.mxu0 0
    %287 = vmatpush2.bf16.msra.mxu0 0
    %288 = vmatprep.subr.bf16.mxu0 0
    %289 = vmatpush2.bf16.msra.mxu0 0
    %290 = vmatprep.subr.bf16.mxu0 0
    %291 = vmatpush2.bf16.msra.mxu0 0
    %292 = vmatprep.subr.bf16.mxu0 0
    %293 = vmatpush2.bf16.msra.mxu0 0
    %294 = vmatprep.subr.bf16.mxu0 0
    %295 = vmatpush2.bf16.msra.mxu0 0
    %296 = vmatprep.subr.bf16.mxu0 0
    %297 = vmatpush2.bf16.msra.mxu0 0
    %298 = vmatprep.subr.bf16.mxu0 0
    %299 = vmatpush2.bf16.msra.mxu0 0
    %300 = vmatprep.subr.bf16.mxu0 0
    %301 = vmatpush2.bf16.msra.mxu0 0
    %302 = vmatprep.mubr.bf16.mxu0 0
    %303 = vmatmul.mubr.bf16.gmra.mxu0 %v268
    %v304 = vpop.f32.mrf.mxu0
    %v305 = vadd.f32 0.0, %v304
    %v306 = vpop.f32.mrf.mxu0
    %v307 = vadd.f32 0.0, %v306
    %v308 = vpop.f32.mrf.mxu0
    %v309 = vpop.f32.mrf.mxu0
    %310 = vdwg.mxu0
    %311 = vmatprep.subr.bf16.mxu0 0
    %312 = vmatpush1.bf16.msra.mxu0 0
    %313 = vmatprep.subr.bf16.mxu0 0
    %314 = vmatpush1.bf16.msra.mxu0 0
    %315 = vmatprep.subr.bf16.mxu0 0
    %316 = vmatpush1.bf16.msra.mxu0 0
    %317 = vmatprep.subr.bf16.mxu0 0
    %318 = vmatpush1.bf16.msra.mxu0 0
    %319 = vmatprep.subr.bf16.mxu0 0
    %320 = vmatpush1.bf16.msra.mxu0 0
    %321 = vmatprep.subr.bf16.mxu0 0
    %322 = vmatpush1.bf16.msra.mxu0 0
    %323 = vmatprep.subr.bf16.mxu0 %v257
    %324 = vmatpush1.bf16.msra.mxu0 %v256
    %325 = vmatprep.subr.bf16.mxu0 %v253
    %326 = vmatpush1.bf16.msra.mxu0 %v252
    %327 = vmatprep.subr.bf16.mxu0 0
    %328 = vmatpush2.bf16.msra.mxu0 0
    %329 = vmatprep.subr.bf16.mxu0 0
    %330 = vmatpush2.bf16.msra.mxu0 0
    %331 = vmatprep.subr.bf16.mxu0 0
    %332 = vmatpush2.bf16.msra.mxu0 0
    %333 = vmatprep.subr.bf16.mxu0 0
    %334 = vmatpush2.bf16.msra.mxu0 0
    %335 = vmatprep.subr.bf16.mxu0 0
    %336 = vmatpush2.bf16.msra.mxu0 0
    %337 = vmatprep.subr.bf16.mxu0 0
    %338 = vmatpush2.bf16.msra.mxu0 0
    %339 = vmatprep.subr.bf16.mxu0 0
    %340 = vmatpush2.bf16.msra.mxu0 0
    %341 = vmatprep.subr.bf16.mxu0 0
    %342 = vmatpush2.bf16.msra.mxu0 0
    %343 = vmatprep.mubr.bf16.mxu0 0
    %344 = vmatmul.mubr.bf16.gmra.mxu0 %v268
    %v345 = vpop.f32.mrf.mxu0
    %v346 = vadd.f32 0.0, %v345
    %v347 = vpop.f32.mrf.mxu0
    %v348 = vadd.f32 0.0, %v347
    %v349 = vpop.f32.mrf.mxu0
    %v350 = vpop.f32.mrf.mxu0
    %351 = vdwg.mxu0
    %v352 = vadd.f32 %v305, %v175
    %v353 = vadd.f32 %v307, %v177
    %v354 = vadd.f32 %v346, %v216
    %v355 = vxor.u32 %v352, 2147483648
    %v356 = vxor.u32 %v353, 2147483648
    %v357 = vxor.u32 %v354, 2147483648
    %v358 = vmul.f32 %v355, 1.442695
    %v359 = vpow.pop %v358
    %v360 = vmul.f32 %v356, 1.442695
    %v361 = vpow.pop %v360
    %v362 = vmul.f32 %v357, 1.442695
    %v363 = vpow.pop %v362
    %v364 = vadd.f32 %v359, 1.0
    %v365 = vadd.f32 %v361, 1.0
    %v366 = vadd.f32 %v363, 1.0
    %v367 = vrcp.pop %v364
    %v368 = vmul.f32 1.0, %v367
    %v369 = vrcp.pop %v365
    %v370 = vmul.f32 1.0, %v369
    %v371 = vrcp.pop %v366
    %v372 = vmul.f32 1.0, %v371
    %vm373 = vcmp.eq.s32.totalorder %v225, 0
    %375 = vset.pattern.permute.xlu0 1
    %376 = vperm.xlu0 %375, %v354
    %v377 = vpop.permute.xlu0 %376
    %v379 = vsel %vm373, %v377, 0.0
    %381 = vset.pattern.permute.xlu0 0
    %382 = vperm.xlu0 %381, %v372
    %v383 = vpop.permute.xlu0 %382
    %v385 = vsel %vm373, %v383, 0.0
    %vm386 = vcmp.lt.f32.partialorder %v223, %v372
    %v387 = vsel %vm386, 1, 0
    %v388 = vsub.f32 1.0, %v372
    %v390 = vlaneseq
    %v391 = vshrl.u32 %v390, 7
    %v392 = vsub.s32 0, %v391
    %v393 = vrot.slane %v222, %v392
    %v395 = vadd.f32 %v348, %v393
    %v396 = vmul.f32 %v368, %v395
    %v397 = vadd.f32 %v218, %v396
    %v398 = vtanh.pop %v397
    %v399 = vsub.f32 1.0, %v370
    %v400 = vmul.f32 %v399, %v398
    %v401 = vmul.f32 %v370, 0.0
    %v402 = vadd.f32 %v400, %v401
    %v403 = vpack.c.bf16 %v402, %v402
    %v405 = vsel %vm266, %v403, 0
    %407 = vmatprep.subr.bf16.mxu0 0
    %408 = vmatpush1.bf16.msra.mxu0 0
    %409 = vmatprep.subr.bf16.mxu0 0
    %410 = vmatpush1.bf16.msra.mxu0 0
    %411 = vmatprep.subr.bf16.mxu0 0
    %412 = vmatpush1.bf16.msra.mxu0 0
    %413 = vmatprep.subr.bf16.mxu0 0
    %414 = vmatpush1.bf16.msra.mxu0 0
    %415 = vmatprep.subr.bf16.mxu0 0
    %416 = vmatpush1.bf16.msra.mxu0 0
    %417 = vmatprep.subr.bf16.mxu0 0
    %418 = vmatpush1.bf16.msra.mxu0 0
    %419 = vmatprep.subr.bf16.mxu0 %v255
    %420 = vmatpush1.bf16.msra.mxu0 %v254
    %421 = vmatprep.subr.bf16.mxu0 %v251
    %422 = vmatpush1.bf16.msra.mxu0 %v250
    %423 = vmatprep.subr.bf16.mxu0 0
    %424 = vmatpush2.bf16.msra.mxu0 0
    %425 = vmatprep.subr.bf16.mxu0 0
    %426 = vmatpush2.bf16.msra.mxu0 0
    %427 = vmatprep.subr.bf16.mxu0 0
    %428 = vmatpush2.bf16.msra.mxu0 0
    %429 = vmatprep.subr.bf16.mxu0 0
    %430 = vmatpush2.bf16.msra.mxu0 0
    %431 = vmatprep.subr.bf16.mxu0 0
    %432 = vmatpush2.bf16.msra.mxu0 0
    %433 = vmatprep.subr.bf16.mxu0 0
    %434 = vmatpush2.bf16.msra.mxu0 0
    %435 = vmatprep.subr.bf16.mxu0 0
    %436 = vmatpush2.bf16.msra.mxu0 0
    %437 = vmatprep.subr.bf16.mxu0 0
    %438 = vmatpush2.bf16.msra.mxu0 0
    %439 = vmatprep.mubr.bf16.mxu0 0
    %440 = vmatmul.mubr.bf16.gmra.mxu0 %v405
    %v441 = vpop.f32.mrf.mxu0
    %v442 = vadd.f32 0.0, %v441
    %v443 = vpop.f32.mrf.mxu0
    %v444 = vadd.f32 0.0, %v443
    %v445 = vpop.f32.mrf.mxu0
    %v446 = vpop.f32.mrf.mxu0
    %447 = vdwg.mxu0
    %448 = vmatprep.subr.bf16.mxu0 0
    %449 = vmatpush1.bf16.msra.mxu0 0
    %450 = vmatprep.subr.bf16.mxu0 0
    %451 = vmatpush1.bf16.msra.mxu0 0
    %452 = vmatprep.subr.bf16.mxu0 0
    %453 = vmatpush1.bf16.msra.mxu0 0
    %454 = vmatprep.subr.bf16.mxu0 0
    %455 = vmatpush1.bf16.msra.mxu0 0
    %456 = vmatprep.subr.bf16.mxu0 0
    %457 = vmatpush1.bf16.msra.mxu0 0
    %458 = vmatprep.subr.bf16.mxu0 0
    %459 = vmatpush1.bf16.msra.mxu0 0
    %460 = vmatprep.subr.bf16.mxu0 %v257
    %461 = vmatpush1.bf16.msra.mxu0 %v256
    %462 = vmatprep.subr.bf16.mxu0 %v253
    %463 = vmatpush1.bf16.msra.mxu0 %v252
    %464 = vmatprep.subr.bf16.mxu0 0
    %465 = vmatpush2.bf16.msra.mxu0 0
    %466 = vmatprep.subr.bf16.mxu0 0
    %467 = vmatpush2.bf16.msra.mxu0 0
    %468 = vmatprep.subr.bf16.mxu0 0
    %469 = vmatpush2.bf16.msra.mxu0 0
    %470 = vmatprep.subr.bf16.mxu0 0
    %471 = vmatpush2.bf16.msra.mxu0 0
    %472 = vmatprep.subr.bf16.mxu0 0
    %473 = vmatpush2.bf16.msra.mxu0 0
    %474 = vmatprep.subr.bf16.mxu0 0
    %475 = vmatpush2.bf16.msra.mxu0 0
    %476 = vmatprep.subr.bf16.mxu0 0
    %477 = vmatpush2.bf16.msra.mxu0 0
    %478 = vmatprep.subr.bf16.mxu0 0
    %479 = vmatpush2.bf16.msra.mxu0 0
    %480 = vmatprep.mubr.bf16.mxu0 0
    %481 = vmatmul.mubr.bf16.gmra.mxu0 %v405
    %v482 = vpop.f32.mrf.mxu0
    %v483 = vadd.f32 0.0, %v482
    %v484 = vpop.f32.mrf.mxu0
    %v485 = vadd.f32 0.0, %v484
    %v486 = vpop.f32.mrf.mxu0
    %v487 = vpop.f32.mrf.mxu0
    %488 = vdwg.mxu0
    %v489 = vadd.f32 %v442, %v175
    %v490 = vadd.f32 %v444, %v177
    %v491 = vadd.f32 %v483, %v216
    %v492 = vxor.u32 %v489, 2147483648
    %v493 = vxor.u32 %v490, 2147483648
    %v494 = vxor.u32 %v491, 2147483648
    %v495 = vmul.f32 %v492, 1.442695
    %v496 = vpow.pop %v495
    %v497 = vmul.f32 %v493, 1.442695
    %v498 = vpow.pop %v497
    %v499 = vmul.f32 %v494, 1.442695
    %v500 = vpow.pop %v499
    %v501 = vadd.f32 %v496, 1.0
    %v502 = vadd.f32 %v498, 1.0
    %v503 = vadd.f32 %v500, 1.0
    %v504 = vrcp.pop %v501
    %v505 = vmul.f32 1.0, %v504
    %v506 = vrcp.pop %v502
    %v507 = vmul.f32 1.0, %v506
    %v508 = vrcp.pop %v503
    %v509 = vmul.f32 1.0, %v508
    %vm510 = vcmp.eq.s32.totalorder %v225, 1
    %512 = vset.pattern.permute.xlu0 1
    %513 = vperm.xlu0 %512, %v491
    %v514 = vpop.permute.xlu0 %513
    %v516 = vsel %vm510, %v514, %v379
    %v517 = vmul.f32 %v388, %v509
    %519 = vset.pattern.permute.xlu0 0
    %520 = vperm.xlu0 %519, %v517
    %v521 = vpop.permute.xlu0 %520
    %v523 = vsel %vm510, %v521, %v385
    %525 = vrot.lane.b32.xlu0 %v509, 1
    %v526 = vpop.permute.xlu0 %525
    %vm528 = vcmp.lt.f32.partialorder %v223, %v526
    %vm529 = vcmp.eq.s32.totalorder %v387, 0
    %v530 = vsel %vm528, 1, 0
    %531 = vrot.lane.b32.xlu0 %v530, 127
    %v532 = vpop.permute.xlu0 %531
    %vm533 = vcmp.ne.s32.totalorder %v532, 0
    %vm534 = vmand %vm529, %vm533
    %v535 = vsel %vm534, 2, %v387
    %v536 = vsub.f32 1.0, %v509
    %v537 = vmul.f32 %v388, %v536
    %v538 = vadd.f32 %v485, %v393
    %v539 = vmul.f32 %v505, %v538
    %v540 = vadd.f32 %v218, %v539
    %v541 = vtanh.pop %v540
    %v542 = vsub.f32 1.0, %v507
    %v543 = vmul.f32 %v542, %v541
    %v544 = vmul.f32 %v507, %v402
    %v545 = vadd.f32 %v543, %v544
    %v546 = vpack.c.bf16 %v545, %v545
    %v548 = vsel %vm266, %v546, 0
    %550 = vmatprep.subr.bf16.mxu0 0
    %551 = vmatpush1.bf16.msra.mxu0 0
    %552 = vmatprep.subr.bf16.mxu0 0
    %553 = vmatpush1.bf16.msra.mxu0 0
    %554 = vmatprep.subr.bf16.mxu0 0
    %555 = vmatpush1.bf16.msra.mxu0 0
    %556 = vmatprep.subr.bf16.mxu0 0
    %557 = vmatpush1.bf16.msra.mxu0 0
    %558 = vmatprep.subr.bf16.mxu0 0
    %559 = vmatpush1.bf16.msra.mxu0 0
    %560 = vmatprep.subr.bf16.mxu0 0
    %561 = vmatpush1.bf16.msra.mxu0 0
    %562 = vmatprep.subr.bf16.mxu0 %v255
    %563 = vmatpush1.bf16.msra.mxu0 %v254
    %564 = vmatprep.subr.bf16.mxu0 %v251
    %565 = vmatpush1.bf16.msra.mxu0 %v250
    %566 = vmatprep.subr.bf16.mxu0 0
    %567 = vmatpush2.bf16.msra.mxu0 0
    %568 = vmatprep.subr.bf16.mxu0 0
    %569 = vmatpush2.bf16.msra.mxu0 0
    %570 = vmatprep.subr.bf16.mxu0 0
    %571 = vmatpush2.bf16.msra.mxu0 0
    %572 = vmatprep.subr.bf16.mxu0 0
    %573 = vmatpush2.bf16.msra.mxu0 0
    %574 = vmatprep.subr.bf16.mxu0 0
    %575 = vmatpush2.bf16.msra.mxu0 0
    %576 = vmatprep.subr.bf16.mxu0 0
    %577 = vmatpush2.bf16.msra.mxu0 0
    %578 = vmatprep.subr.bf16.mxu0 0
    %579 = vmatpush2.bf16.msra.mxu0 0
    %580 = vmatprep.subr.bf16.mxu0 0
    %581 = vmatpush2.bf16.msra.mxu0 0
    %582 = vmatprep.mubr.bf16.mxu0 0
    %583 = vmatmul.mubr.bf16.gmra.mxu0 %v548
    %v584 = vpop.f32.mrf.mxu0
    %v585 = vadd.f32 0.0, %v584
    %v586 = vpop.f32.mrf.mxu0
    %v587 = vadd.f32 0.0, %v586
    %v588 = vpop.f32.mrf.mxu0
    %v589 = vpop.f32.mrf.mxu0
    %590 = vdwg.mxu0
    %591 = vmatprep.subr.bf16.mxu0 0
    %592 = vmatpush1.bf16.msra.mxu0 0
    %593 = vmatprep.subr.bf16.mxu0 0
    %594 = vmatpush1.bf16.msra.mxu0 0
    %595 = vmatprep.subr.bf16.mxu0 0
    %596 = vmatpush1.bf16.msra.mxu0 0
    %597 = vmatprep.subr.bf16.mxu0 0
    %598 = vmatpush1.bf16.msra.mxu0 0
    %599 = vmatprep.subr.bf16.mxu0 0
    %600 = vmatpush1.bf16.msra.mxu0 0
    %601 = vmatprep.subr.bf16.mxu0 0
    %602 = vmatpush1.bf16.msra.mxu0 0
    %603 = vmatprep.subr.bf16.mxu0 %v257
    %604 = vmatpush1.bf16.msra.mxu0 %v256
    %605 = vmatprep.subr.bf16.mxu0 %v253
    %606 = vmatpush1.bf16.msra.mxu0 %v252
    %607 = vmatprep.subr.bf16.mxu0 0
    %608 = vmatpush2.bf16.msra.mxu0 0
    %609 = vmatprep.subr.bf16.mxu0 0
    %610 = vmatpush2.bf16.msra.mxu0 0
    %611 = vmatprep.subr.bf16.mxu0 0
    %612 = vmatpush2.bf16.msra.mxu0 0
    %613 = vmatprep.subr.bf16.mxu0 0
    %614 = vmatpush2.bf16.msra.mxu0 0
    %615 = vmatprep.subr.bf16.mxu0 0
    %616 = vmatpush2.bf16.msra.mxu0 0
    %617 = vmatprep.subr.bf16.mxu0 0
    %618 = vmatpush2.bf16.msra.mxu0 0
    %619 = vmatprep.subr.bf16.mxu0 0
    %620 = vmatpush2.bf16.msra.mxu0 0
    %621 = vmatprep.subr.bf16.mxu0 0
    %622 = vmatpush2.bf16.msra.mxu0 0
    %623 = vmatprep.mubr.bf16.mxu0 0
    %624 = vmatmul.mubr.bf16.gmra.mxu0 %v548
    %v625 = vpop.f32.mrf.mxu0
    %v626 = vadd.f32 0.0, %v625
    %v627 = vpop.f32.mrf.mxu0
    %v628 = vadd.f32 0.0, %v627
    %v629 = vpop.f32.mrf.mxu0
    %v630 = vpop.f32.mrf.mxu0
    %631 = vdwg.mxu0
    %v632 = vadd.f32 %v585, %v175
    %v633 = vadd.f32 %v587, %v177
    %v634 = vadd.f32 %v626, %v216
    %v635 = vxor.u32 %v632, 2147483648
    %v636 = vxor.u32 %v633, 2147483648
    %v637 = vxor.u32 %v634, 2147483648
    %v638 = vmul.f32 %v635, 1.442695
    %v639 = vpow.pop %v638
    %v640 = vmul.f32 %v636, 1.442695
    %v641 = vpow.pop %v640
    %v642 = vmul.f32 %v637, 1.442695
    %v643 = vpow.pop %v642
    %v644 = vadd.f32 %v639, 1.0
    %v645 = vadd.f32 %v641, 1.0
    %v646 = vadd.f32 %v643, 1.0
    %v647 = vrcp.pop %v644
    %v648 = vmul.f32 1.0, %v647
    %v649 = vrcp.pop %v645
    %v650 = vmul.f32 1.0, %v649
    %v651 = vrcp.pop %v646
    %v652 = vmul.f32 1.0, %v651
    %vm653 = vcmp.eq.s32.totalorder %v225, 2
    %655 = vset.pattern.permute.xlu0 1
    %656 = vperm.xlu0 %655, %v634
    %v657 = vpop.permute.xlu0 %656
    %v659 = vsel %vm653, %v657, %v516
    %v660 = vmul.f32 %v537, %v652
    %662 = vset.pattern.permute.xlu0 0
    %663 = vperm.xlu0 %662, %v660
    %v664 = vpop.permute.xlu0 %663
    %v666 = vsel %vm653, %v664, %v523
    %668 = vrot.lane.b32.xlu0 %v652, 2
    %v669 = vpop.permute.xlu0 %668
    %vm671 = vcmp.lt.f32.partialorder %v223, %v669
    %vm672 = vcmp.eq.s32.totalorder %v535, 0
    %v673 = vsel %vm671, 1, 0
    %674 = vrot.lane.b32.xlu0 %v673, 126
    %v675 = vpop.permute.xlu0 %674
    %vm676 = vcmp.ne.s32.totalorder %v675, 0
    %vm677 = vmand %vm672, %vm676
    %v678 = vsel %vm677, 3, %v535
    %v679 = vsub.f32 1.0, %v652
    %v680 = vmul.f32 %v537, %v679
    %v681 = vadd.f32 %v628, %v393
    %v682 = vmul.f32 %v648, %v681
    %v683 = vadd.f32 %v218, %v682
    %v684 = vtanh.pop %v683
    %v685 = vsub.f32 1.0, %v650
    %v686 = vmul.f32 %v685, %v684
    %v687 = vmul.f32 %v650, %v545
    %v688 = vadd.f32 %v686, %v687
    %v689 = vpack.c.bf16 %v688, %v688
    %v691 = vsel %vm266, %v689, 0
    %693 = vmatprep.subr.bf16.mxu0 0
    %694 = vmatpush1.bf16.msra.mxu0 0
    %695 = vmatprep.subr.bf16.mxu0 0
    %696 = vmatpush1.bf16.msra.mxu0 0
    %697 = vmatprep.subr.bf16.mxu0 0
    %698 = vmatpush1.bf16.msra.mxu0 0
    %699 = vmatprep.subr.bf16.mxu0 0
    %700 = vmatpush1.bf16.msra.mxu0 0
    %701 = vmatprep.subr.bf16.mxu0 0
    %702 = vmatpush1.bf16.msra.mxu0 0
    %703 = vmatprep.subr.bf16.mxu0 0
    %704 = vmatpush1.bf16.msra.mxu0 0
    %705 = vmatprep.subr.bf16.mxu0 %v255
    %706 = vmatpush1.bf16.msra.mxu0 %v254
    %707 = vmatprep.subr.bf16.mxu0 %v251
    %708 = vmatpush1.bf16.msra.mxu0 %v250
    %709 = vmatprep.subr.bf16.mxu0 0
    %710 = vmatpush2.bf16.msra.mxu0 0
    %711 = vmatprep.subr.bf16.mxu0 0
    %712 = vmatpush2.bf16.msra.mxu0 0
    %713 = vmatprep.subr.bf16.mxu0 0
    %714 = vmatpush2.bf16.msra.mxu0 0
    %715 = vmatprep.subr.bf16.mxu0 0
    %716 = vmatpush2.bf16.msra.mxu0 0
    %717 = vmatprep.subr.bf16.mxu0 0
    %718 = vmatpush2.bf16.msra.mxu0 0
    %719 = vmatprep.subr.bf16.mxu0 0
    %720 = vmatpush2.bf16.msra.mxu0 0
    %721 = vmatprep.subr.bf16.mxu0 0
    %722 = vmatpush2.bf16.msra.mxu0 0
    %723 = vmatprep.subr.bf16.mxu0 0
    %724 = vmatpush2.bf16.msra.mxu0 0
    %725 = vmatprep.mubr.bf16.mxu0 0
    %726 = vmatmul.mubr.bf16.gmra.mxu0 %v691
    %v727 = vpop.f32.mrf.mxu0
    %v728 = vadd.f32 0.0, %v727
    %v729 = vpop.f32.mrf.mxu0
    %v730 = vadd.f32 0.0, %v729
    %v731 = vpop.f32.mrf.mxu0
    %v732 = vpop.f32.mrf.mxu0
    %733 = vdwg.mxu0
    %734 = vmatprep.subr.bf16.mxu0 0
    %735 = vmatpush1.bf16.msra.mxu0 0
    %736 = vmatprep.subr.bf16.mxu0 0
    %737 = vmatpush1.bf16.msra.mxu0 0
    %738 = vmatprep.subr.bf16.mxu0 0
    %739 = vmatpush1.bf16.msra.mxu0 0
    %740 = vmatprep.subr.bf16.mxu0 0
    %741 = vmatpush1.bf16.msra.mxu0 0
    %742 = vmatprep.subr.bf16.mxu0 0
    %743 = vmatpush1.bf16.msra.mxu0 0
    %744 = vmatprep.subr.bf16.mxu0 0
    %745 = vmatpush1.bf16.msra.mxu0 0
    %746 = vmatprep.subr.bf16.mxu0 %v257
    %747 = vmatpush1.bf16.msra.mxu0 %v256
    %748 = vmatprep.subr.bf16.mxu0 %v253
    %749 = vmatpush1.bf16.msra.mxu0 %v252
    %750 = vmatprep.subr.bf16.mxu0 0
    %751 = vmatpush2.bf16.msra.mxu0 0
    %752 = vmatprep.subr.bf16.mxu0 0
    %753 = vmatpush2.bf16.msra.mxu0 0
    %754 = vmatprep.subr.bf16.mxu0 0
    %755 = vmatpush2.bf16.msra.mxu0 0
    %756 = vmatprep.subr.bf16.mxu0 0
    %757 = vmatpush2.bf16.msra.mxu0 0
    %758 = vmatprep.subr.bf16.mxu0 0
    %759 = vmatpush2.bf16.msra.mxu0 0
    %760 = vmatprep.subr.bf16.mxu0 0
    %761 = vmatpush2.bf16.msra.mxu0 0
    %762 = vmatprep.subr.bf16.mxu0 0
    %763 = vmatpush2.bf16.msra.mxu0 0
    %764 = vmatprep.subr.bf16.mxu0 0
    %765 = vmatpush2.bf16.msra.mxu0 0
    %766 = vmatprep.mubr.bf16.mxu0 0
    %767 = vmatmul.mubr.bf16.gmra.mxu0 %v691
    %v768 = vpop.f32.mrf.mxu0
    %v769 = vadd.f32 0.0, %v768
    %v770 = vpop.f32.mrf.mxu0
    %v771 = vadd.f32 0.0, %v770
    %v772 = vpop.f32.mrf.mxu0
    %v773 = vpop.f32.mrf.mxu0
    %774 = vdwg.mxu0
    %v775 = vadd.f32 %v728, %v175
    %v776 = vadd.f32 %v730, %v177
    %v777 = vadd.f32 %v769, %v216
    %v778 = vxor.u32 %v775, 2147483648
    %v779 = vxor.u32 %v776, 2147483648
    %v780 = vxor.u32 %v777, 2147483648
    %v781 = vmul.f32 %v778, 1.442695
    %v782 = vpow.pop %v781
    %v783 = vmul.f32 %v779, 1.442695
    %v784 = vpow.pop %v783
    %v785 = vmul.f32 %v780, 1.442695
    %v786 = vpow.pop %v785
    %v787 = vadd.f32 %v782, 1.0
    %v788 = vadd.f32 %v784, 1.0
    %v789 = vadd.f32 %v786, 1.0
    %v790 = vrcp.pop %v787
    %v791 = vmul.f32 1.0, %v790
    %v792 = vrcp.pop %v788
    %v793 = vmul.f32 1.0, %v792
    %v794 = vrcp.pop %v789
    %v795 = vmul.f32 1.0, %v794
    %vm796 = vcmp.eq.s32.totalorder %v225, 3
    %798 = vset.pattern.permute.xlu0 1
    %799 = vperm.xlu0 %798, %v777
    %v800 = vpop.permute.xlu0 %799
    %v802 = vsel %vm796, %v800, %v659
    %v803 = vmul.f32 %v680, %v795
    %805 = vset.pattern.permute.xlu0 0
    %806 = vperm.xlu0 %805, %v803
    %v807 = vpop.permute.xlu0 %806
    %v809 = vsel %vm796, %v807, %v666
    %811 = vrot.lane.b32.xlu0 %v795, 3
    %v812 = vpop.permute.xlu0 %811
    %vm814 = vcmp.lt.f32.partialorder %v223, %v812
    %vm815 = vcmp.eq.s32.totalorder %v678, 0
    %v816 = vsel %vm814, 1, 0
    %817 = vrot.lane.b32.xlu0 %v816, 125
    %v818 = vpop.permute.xlu0 %817
    %vm819 = vcmp.ne.s32.totalorder %v818, 0
    %vm820 = vmand %vm815, %vm819
    %v821 = vsel %vm820, 4, %v678
    %v822 = vsub.f32 1.0, %v795
    %v823 = vmul.f32 %v680, %v822
    %v824 = vadd.f32 %v771, %v393
    %v825 = vmul.f32 %v791, %v824
    %v826 = vadd.f32 %v218, %v825
    %v827 = vtanh.pop %v826
    %v828 = vsub.f32 1.0, %v793
    %v829 = vmul.f32 %v828, %v827
    %v830 = vmul.f32 %v793, %v688
    %v831 = vadd.f32 %v829, %v830
    %v832 = vpack.c.bf16 %v831, %v831
    %v834 = vsel %vm266, %v832, 0
    %836 = vmatprep.subr.bf16.mxu0 0
    %837 = vmatpush1.bf16.msra.mxu0 0
    %838 = vmatprep.subr.bf16.mxu0 0
    %839 = vmatpush1.bf16.msra.mxu0 0
    %840 = vmatprep.subr.bf16.mxu0 0
    %841 = vmatpush1.bf16.msra.mxu0 0
    %842 = vmatprep.subr.bf16.mxu0 0
    %843 = vmatpush1.bf16.msra.mxu0 0
    %844 = vmatprep.subr.bf16.mxu0 0
    %845 = vmatpush1.bf16.msra.mxu0 0
    %846 = vmatprep.subr.bf16.mxu0 0
    %847 = vmatpush1.bf16.msra.mxu0 0
    %848 = vmatprep.subr.bf16.mxu0 %v255
    %849 = vmatpush1.bf16.msra.mxu0 %v254
    %850 = vmatprep.subr.bf16.mxu0 %v251
    %851 = vmatpush1.bf16.msra.mxu0 %v250
    %852 = vmatprep.subr.bf16.mxu0 0
    %853 = vmatpush2.bf16.msra.mxu0 0
    %854 = vmatprep.subr.bf16.mxu0 0
    %855 = vmatpush2.bf16.msra.mxu0 0
    %856 = vmatprep.subr.bf16.mxu0 0
    %857 = vmatpush2.bf16.msra.mxu0 0
    %858 = vmatprep.subr.bf16.mxu0 0
    %859 = vmatpush2.bf16.msra.mxu0 0
    %860 = vmatprep.subr.bf16.mxu0 0
    %861 = vmatpush2.bf16.msra.mxu0 0
    %862 = vmatprep.subr.bf16.mxu0 0
    %863 = vmatpush2.bf16.msra.mxu0 0
    %864 = vmatprep.subr.bf16.mxu0 0
    %865 = vmatpush2.bf16.msra.mxu0 0
    %866 = vmatprep.subr.bf16.mxu0 0
    %867 = vmatpush2.bf16.msra.mxu0 0
    %868 = vmatprep.mubr.bf16.mxu0 0
    %869 = vmatmul.mubr.bf16.gmra.mxu0 %v834
    %v870 = vpop.f32.mrf.mxu0
    %v871 = vadd.f32 0.0, %v870
    %v872 = vpop.f32.mrf.mxu0
    %v873 = vadd.f32 0.0, %v872
    %v874 = vpop.f32.mrf.mxu0
    %v875 = vpop.f32.mrf.mxu0
    %876 = vdwg.mxu0
    %877 = vmatprep.subr.bf16.mxu0 0
    %878 = vmatpush1.bf16.msra.mxu0 0
    %879 = vmatprep.subr.bf16.mxu0 0
    %880 = vmatpush1.bf16.msra.mxu0 0
    %881 = vmatprep.subr.bf16.mxu0 0
    %882 = vmatpush1.bf16.msra.mxu0 0
    %883 = vmatprep.subr.bf16.mxu0 0
    %884 = vmatpush1.bf16.msra.mxu0 0
    %885 = vmatprep.subr.bf16.mxu0 0
    %886 = vmatpush1.bf16.msra.mxu0 0
    %887 = vmatprep.subr.bf16.mxu0 0
    %888 = vmatpush1.bf16.msra.mxu0 0
    %889 = vmatprep.subr.bf16.mxu0 %v257
    %890 = vmatpush1.bf16.msra.mxu0 %v256
    %891 = vmatprep.subr.bf16.mxu0 %v253
    %892 = vmatpush1.bf16.msra.mxu0 %v252
    %893 = vmatprep.subr.bf16.mxu0 0
    %894 = vmatpush2.bf16.msra.mxu0 0
    %895 = vmatprep.subr.bf16.mxu0 0
    %896 = vmatpush2.bf16.msra.mxu0 0
    %897 = vmatprep.subr.bf16.mxu0 0
    %898 = vmatpush2.bf16.msra.mxu0 0
    %899 = vmatprep.subr.bf16.mxu0 0
    %900 = vmatpush2.bf16.msra.mxu0 0
    %901 = vmatprep.subr.bf16.mxu0 0
    %902 = vmatpush2.bf16.msra.mxu0 0
    %903 = vmatprep.subr.bf16.mxu0 0
    %904 = vmatpush2.bf16.msra.mxu0 0
    %905 = vmatprep.subr.bf16.mxu0 0
    %906 = vmatpush2.bf16.msra.mxu0 0
    %907 = vmatprep.subr.bf16.mxu0 0
    %908 = vmatpush2.bf16.msra.mxu0 0
    %909 = vmatprep.mubr.bf16.mxu0 0
    %910 = vmatmul.mubr.bf16.gmra.mxu0 %v834
    %v911 = vpop.f32.mrf.mxu0
    %v912 = vadd.f32 0.0, %v911
    %v913 = vpop.f32.mrf.mxu0
    %v914 = vadd.f32 0.0, %v913
    %v915 = vpop.f32.mrf.mxu0
    %v916 = vpop.f32.mrf.mxu0
    %917 = vdwg.mxu0
    %v918 = vadd.f32 %v871, %v175
    %v919 = vadd.f32 %v873, %v177
    %v920 = vadd.f32 %v912, %v216
    %v921 = vxor.u32 %v918, 2147483648
    %v922 = vxor.u32 %v919, 2147483648
    %v923 = vxor.u32 %v920, 2147483648
    %v924 = vmul.f32 %v921, 1.442695
    %v925 = vpow.pop %v924
    %v926 = vmul.f32 %v922, 1.442695
    %v927 = vpow.pop %v926
    %v928 = vmul.f32 %v923, 1.442695
    %v929 = vpow.pop %v928
    %v930 = vadd.f32 %v925, 1.0
    %v931 = vadd.f32 %v927, 1.0
    %v932 = vadd.f32 %v929, 1.0
    %v933 = vrcp.pop %v930
    %v934 = vmul.f32 1.0, %v933
    %v935 = vrcp.pop %v931
    %v936 = vmul.f32 1.0, %v935
    %v937 = vrcp.pop %v932
    %v938 = vmul.f32 1.0, %v937
    %vm939 = vcmp.eq.s32.totalorder %v225, 4
    %941 = vset.pattern.permute.xlu0 1
    %942 = vperm.xlu0 %941, %v920
    %v943 = vpop.permute.xlu0 %942
    %v945 = vsel %vm939, %v943, %v802
    %v946 = vmul.f32 %v823, %v938
    %948 = vset.pattern.permute.xlu0 0
    %949 = vperm.xlu0 %948, %v946
    %v950 = vpop.permute.xlu0 %949
    %v952 = vsel %vm939, %v950, %v809
    %954 = vrot.lane.b32.xlu0 %v938, 4
    %v955 = vpop.permute.xlu0 %954
    %vm957 = vcmp.lt.f32.partialorder %v223, %v955
    %vm958 = vcmp.eq.s32.totalorder %v821, 0
    %v959 = vsel %vm957, 1, 0
    %960 = vrot.lane.b32.xlu0 %v959, 124
    %v961 = vpop.permute.xlu0 %960
    %vm962 = vcmp.ne.s32.totalorder %v961, 0
    %vm963 = vmand %vm958, %vm962
    %v964 = vsel %vm963, 5, %v821
    %v965 = vsub.f32 1.0, %v938
    %v966 = vmul.f32 %v823, %v965
    %v967 = vadd.f32 %v914, %v393
    %v968 = vmul.f32 %v934, %v967
    %v969 = vadd.f32 %v218, %v968
    %v970 = vtanh.pop %v969
    %v971 = vsub.f32 1.0, %v936
    %v972 = vmul.f32 %v971, %v970
    %v973 = vmul.f32 %v936, %v831
    %v974 = vadd.f32 %v972, %v973
    %v975 = vpack.c.bf16 %v974, %v974
    %v977 = vsel %vm266, %v975, 0
    %979 = vmatprep.subr.bf16.mxu0 0
    %980 = vmatpush1.bf16.msra.mxu0 0
    %981 = vmatprep.subr.bf16.mxu0 0
    %982 = vmatpush1.bf16.msra.mxu0 0
    %983 = vmatprep.subr.bf16.mxu0 0
    %984 = vmatpush1.bf16.msra.mxu0 0
    %985 = vmatprep.subr.bf16.mxu0 0
    %986 = vmatpush1.bf16.msra.mxu0 0
    %987 = vmatprep.subr.bf16.mxu0 0
    %988 = vmatpush1.bf16.msra.mxu0 0
    %989 = vmatprep.subr.bf16.mxu0 0
    %990 = vmatpush1.bf16.msra.mxu0 0
    %991 = vmatprep.subr.bf16.mxu0 %v255
    %992 = vmatpush1.bf16.msra.mxu0 %v254
    %993 = vmatprep.subr.bf16.mxu0 %v251
    %994 = vmatpush1.bf16.msra.mxu0 %v250
    %995 = vmatprep.subr.bf16.mxu0 0
    %996 = vmatpush2.bf16.msra.mxu0 0
    %997 = vmatprep.subr.bf16.mxu0 0
    %998 = vmatpush2.bf16.msra.mxu0 0
    %999 = vmatprep.subr.bf16.mxu0 0
    %1000 = vmatpush2.bf16.msra.mxu0 0
    %1001 = vmatprep.subr.bf16.mxu0 0
    %1002 = vmatpush2.bf16.msra.mxu0 0
    %1003 = vmatprep.subr.bf16.mxu0 0
    %1004 = vmatpush2.bf16.msra.mxu0 0
    %1005 = vmatprep.subr.bf16.mxu0 0
    %1006 = vmatpush2.bf16.msra.mxu0 0
    %1007 = vmatprep.subr.bf16.mxu0 0
    %1008 = vmatpush2.bf16.msra.mxu0 0
    %1009 = vmatprep.subr.bf16.mxu0 0
    %1010 = vmatpush2.bf16.msra.mxu0 0
    %1011 = vmatprep.mubr.bf16.mxu0 0
    %1012 = vmatmul.mubr.bf16.gmra.mxu0 %v977
    %v1013 = vpop.f32.mrf.mxu0
    %v1014 = vadd.f32 0.0, %v1013
    %v1015 = vpop.f32.mrf.mxu0
    %v1016 = vadd.f32 0.0, %v1015
    %v1017 = vpop.f32.mrf.mxu0
    %v1018 = vpop.f32.mrf.mxu0
    %1019 = vdwg.mxu0
    %1020 = vmatprep.subr.bf16.mxu0 0
    %1021 = vmatpush1.bf16.msra.mxu0 0
    %1022 = vmatprep.subr.bf16.mxu0 0
    %1023 = vmatpush1.bf16.msra.mxu0 0
    %1024 = vmatprep.subr.bf16.mxu0 0
    %1025 = vmatpush1.bf16.msra.mxu0 0
    %1026 = vmatprep.subr.bf16.mxu0 0
    %1027 = vmatpush1.bf16.msra.mxu0 0
    %1028 = vmatprep.subr.bf16.mxu0 0
    %1029 = vmatpush1.bf16.msra.mxu0 0
    %1030 = vmatprep.subr.bf16.mxu0 0
    %1031 = vmatpush1.bf16.msra.mxu0 0
    %1032 = vmatprep.subr.bf16.mxu0 %v257
    %1033 = vmatpush1.bf16.msra.mxu0 %v256
    %1034 = vmatprep.subr.bf16.mxu0 %v253
    %1035 = vmatpush1.bf16.msra.mxu0 %v252
    %1036 = vmatprep.subr.bf16.mxu0 0
    %1037 = vmatpush2.bf16.msra.mxu0 0
    %1038 = vmatprep.subr.bf16.mxu0 0
    %1039 = vmatpush2.bf16.msra.mxu0 0
    %1040 = vmatprep.subr.bf16.mxu0 0
    %1041 = vmatpush2.bf16.msra.mxu0 0
    %1042 = vmatprep.subr.bf16.mxu0 0
    %1043 = vmatpush2.bf16.msra.mxu0 0
    %1044 = vmatprep.subr.bf16.mxu0 0
    %1045 = vmatpush2.bf16.msra.mxu0 0
    %1046 = vmatprep.subr.bf16.mxu0 0
    %1047 = vmatpush2.bf16.msra.mxu0 0
    %1048 = vmatprep.subr.bf16.mxu0 0
    %1049 = vmatpush2.bf16.msra.mxu0 0
    %1050 = vmatprep.subr.bf16.mxu0 0
    %1051 = vmatpush2.bf16.msra.mxu0 0
    %1052 = vmatprep.mubr.bf16.mxu0 0
    %1053 = vmatmul.mubr.bf16.gmra.mxu0 %v977
    %v1054 = vpop.f32.mrf.mxu0
    %v1055 = vadd.f32 0.0, %v1054
    %v1056 = vpop.f32.mrf.mxu0
    %v1057 = vadd.f32 0.0, %v1056
    %v1058 = vpop.f32.mrf.mxu0
    %v1059 = vpop.f32.mrf.mxu0
    %1060 = vdwg.mxu0
    %v1061 = vadd.f32 %v1014, %v175
    %v1062 = vadd.f32 %v1016, %v177
    %v1063 = vadd.f32 %v1055, %v216
    %v1064 = vxor.u32 %v1061, 2147483648
    %v1065 = vxor.u32 %v1062, 2147483648
    %v1066 = vxor.u32 %v1063, 2147483648
    %v1067 = vmul.f32 %v1064, 1.442695
    %v1068 = vpow.pop %v1067
    %v1069 = vmul.f32 %v1065, 1.442695
    %v1070 = vpow.pop %v1069
    %v1071 = vmul.f32 %v1066, 1.442695
    %v1072 = vpow.pop %v1071
    %v1073 = vadd.f32 %v1068, 1.0
    %v1074 = vadd.f32 %v1070, 1.0
    %v1075 = vadd.f32 %v1072, 1.0
    %v1076 = vrcp.pop %v1073
    %v1077 = vmul.f32 1.0, %v1076
    %v1078 = vrcp.pop %v1074
    %v1079 = vmul.f32 1.0, %v1078
    %v1080 = vrcp.pop %v1075
    %v1081 = vmul.f32 1.0, %v1080
    %vm1082 = vcmp.eq.s32.totalorder %v225, 5
    %1084 = vset.pattern.permute.xlu0 1
    %1085 = vperm.xlu0 %1084, %v1063
    %v1086 = vpop.permute.xlu0 %1085
    %v1088 = vsel %vm1082, %v1086, %v945
    %v1089 = vmul.f32 %v966, %v1081
    %1091 = vset.pattern.permute.xlu0 0
    %1092 = vperm.xlu0 %1091, %v1089
    %v1093 = vpop.permute.xlu0 %1092
    %v1095 = vsel %vm1082, %v1093, %v952
    %1097 = vrot.lane.b32.xlu0 %v1081, 5
    %v1098 = vpop.permute.xlu0 %1097
    %vm1100 = vcmp.lt.f32.partialorder %v223, %v1098
    %vm1101 = vcmp.eq.s32.totalorder %v964, 0
    %v1102 = vsel %vm1100, 1, 0
    %1103 = vrot.lane.b32.xlu0 %v1102, 123
    %v1104 = vpop.permute.xlu0 %1103
    %vm1105 = vcmp.ne.s32.totalorder %v1104, 0
    %vm1106 = vmand %vm1101, %vm1105
    %v1107 = vsel %vm1106, 6, %v964
    %v1108 = vsub.f32 1.0, %v1081
    %v1109 = vmul.f32 %v966, %v1108
    %v1110 = vadd.f32 %v1057, %v393
    %v1111 = vmul.f32 %v1077, %v1110
    %v1112 = vadd.f32 %v218, %v1111
    %v1113 = vtanh.pop %v1112
    %v1114 = vsub.f32 1.0, %v1079
    %v1115 = vmul.f32 %v1114, %v1113
    %v1116 = vmul.f32 %v1079, %v974
    %v1117 = vadd.f32 %v1115, %v1116
    %v1118 = vpack.c.bf16 %v1117, %v1117
    %v1120 = vsel %vm266, %v1118, 0
    %1122 = vmatprep.subr.bf16.mxu0 0
    %1123 = vmatpush1.bf16.msra.mxu0 0
    %1124 = vmatprep.subr.bf16.mxu0 0
    %1125 = vmatpush1.bf16.msra.mxu0 0
    %1126 = vmatprep.subr.bf16.mxu0 0
    %1127 = vmatpush1.bf16.msra.mxu0 0
    %1128 = vmatprep.subr.bf16.mxu0 0
    %1129 = vmatpush1.bf16.msra.mxu0 0
    %1130 = vmatprep.subr.bf16.mxu0 0
    %1131 = vmatpush1.bf16.msra.mxu0 0
    %1132 = vmatprep.subr.bf16.mxu0 0
    %1133 = vmatpush1.bf16.msra.mxu0 0
    %1134 = vmatprep.subr.bf16.mxu0 %v255
    %1135 = vmatpush1.bf16.msra.mxu0 %v254
    %1136 = vmatprep.subr.bf16.mxu0 %v251
    %1137 = vmatpush1.bf16.msra.mxu0 %v250
    %1138 = vmatprep.subr.bf16.mxu0 0
    %1139 = vmatpush2.bf16.msra.mxu0 0
    %1140 = vmatprep.subr.bf16.mxu0 0
    %1141 = vmatpush2.bf16.msra.mxu0 0
    %1142 = vmatprep.subr.bf16.mxu0 0
    %1143 = vmatpush2.bf16.msra.mxu0 0
    %1144 = vmatprep.subr.bf16.mxu0 0
    %1145 = vmatpush2.bf16.msra.mxu0 0
    %1146 = vmatprep.subr.bf16.mxu0 0
    %1147 = vmatpush2.bf16.msra.mxu0 0
    %1148 = vmatprep.subr.bf16.mxu0 0
    %1149 = vmatpush2.bf16.msra.mxu0 0
    %1150 = vmatprep.subr.bf16.mxu0 0
    %1151 = vmatpush2.bf16.msra.mxu0 0
    %1152 = vmatprep.subr.bf16.mxu0 0
    %1153 = vmatpush2.bf16.msra.mxu0 0
    %1154 = vmatprep.mubr.bf16.mxu0 0
    %1155 = vmatmul.mubr.bf16.gmra.mxu0 %v1120
    %v1156 = vpop.f32.mrf.mxu0
    %v1157 = vadd.f32 0.0, %v1156
    %v1158 = vpop.f32.mrf.mxu0
    %v1159 = vadd.f32 0.0, %v1158
    %v1160 = vpop.f32.mrf.mxu0
    %v1161 = vpop.f32.mrf.mxu0
    %1162 = vdwg.mxu0
    %1163 = vmatprep.subr.bf16.mxu0 0
    %1164 = vmatpush1.bf16.msra.mxu0 0
    %1165 = vmatprep.subr.bf16.mxu0 0
    %1166 = vmatpush1.bf16.msra.mxu0 0
    %1167 = vmatprep.subr.bf16.mxu0 0
    %1168 = vmatpush1.bf16.msra.mxu0 0
    %1169 = vmatprep.subr.bf16.mxu0 0
    %1170 = vmatpush1.bf16.msra.mxu0 0
    %1171 = vmatprep.subr.bf16.mxu0 0
    %1172 = vmatpush1.bf16.msra.mxu0 0
    %1173 = vmatprep.subr.bf16.mxu0 0
    %1174 = vmatpush1.bf16.msra.mxu0 0
    %1175 = vmatprep.subr.bf16.mxu0 %v257
    %1176 = vmatpush1.bf16.msra.mxu0 %v256
    %1177 = vmatprep.subr.bf16.mxu0 %v253
    %1178 = vmatpush1.bf16.msra.mxu0 %v252
    %1179 = vmatprep.subr.bf16.mxu0 0
    %1180 = vmatpush2.bf16.msra.mxu0 0
    %1181 = vmatprep.subr.bf16.mxu0 0
    %1182 = vmatpush2.bf16.msra.mxu0 0
    %1183 = vmatprep.subr.bf16.mxu0 0
    %1184 = vmatpush2.bf16.msra.mxu0 0
    %1185 = vmatprep.subr.bf16.mxu0 0
    %1186 = vmatpush2.bf16.msra.mxu0 0
    %1187 = vmatprep.subr.bf16.mxu0 0
    %1188 = vmatpush2.bf16.msra.mxu0 0
    %1189 = vmatprep.subr.bf16.mxu0 0
    %1190 = vmatpush2.bf16.msra.mxu0 0
    %1191 = vmatprep.subr.bf16.mxu0 0
    %1192 = vmatpush2.bf16.msra.mxu0 0
    %1193 = vmatprep.subr.bf16.mxu0 0
    %1194 = vmatpush2.bf16.msra.mxu0 0
    %1195 = vmatprep.mubr.bf16.mxu0 0
    %1196 = vmatmul.mubr.bf16.gmra.mxu0 %v1120
    %v1197 = vpop.f32.mrf.mxu0
    %v1198 = vadd.f32 0.0, %v1197
    %v1199 = vpop.f32.mrf.mxu0
    %v1200 = vadd.f32 0.0, %v1199
    %v1201 = vpop.f32.mrf.mxu0
    %v1202 = vpop.f32.mrf.mxu0
    %1203 = vdwg.mxu0
    %v1204 = vadd.f32 %v1157, %v175
    %v1205 = vadd.f32 %v1159, %v177
    %v1206 = vadd.f32 %v1198, %v216
    %v1207 = vxor.u32 %v1204, 2147483648
    %v1208 = vxor.u32 %v1205, 2147483648
    %v1209 = vxor.u32 %v1206, 2147483648
    %v1210 = vmul.f32 %v1207, 1.442695
    %v1211 = vpow.pop %v1210
    %v1212 = vmul.f32 %v1208, 1.442695
    %v1213 = vpow.pop %v1212
    %v1214 = vmul.f32 %v1209, 1.442695
    %v1215 = vpow.pop %v1214
    %v1216 = vadd.f32 %v1211, 1.0
    %v1217 = vadd.f32 %v1213, 1.0
    %v1218 = vadd.f32 %v1215, 1.0
    %v1219 = vrcp.pop %v1216
    %v1220 = vmul.f32 1.0, %v1219
    %v1221 = vrcp.pop %v1217
    %v1222 = vmul.f32 1.0, %v1221
    %v1223 = vrcp.pop %v1218
    %v1224 = vmul.f32 1.0, %v1223
    %vm1225 = vcmp.eq.s32.totalorder %v225, 6
    %1227 = vset.pattern.permute.xlu0 1
    %1228 = vperm.xlu0 %1227, %v1206
    %v1229 = vpop.permute.xlu0 %1228
    %v1231 = vsel %vm1225, %v1229, %v1088
    %v1232 = vmul.f32 %v1109, %v1224
    %1234 = vset.pattern.permute.xlu0 0
    %1235 = vperm.xlu0 %1234, %v1232
    %v1236 = vpop.permute.xlu0 %1235
    %v1238 = vsel %vm1225, %v1236, %v1095
    %1240 = vrot.lane.b32.xlu0 %v1224, 6
    %v1241 = vpop.permute.xlu0 %1240
    %vm1243 = vcmp.lt.f32.partialorder %v223, %v1241
    %vm1244 = vcmp.eq.s32.totalorder %v1107, 0
    %v1245 = vsel %vm1243, 1, 0
    %1246 = vrot.lane.b32.xlu0 %v1245, 122
    %v1247 = vpop.permute.xlu0 %1246
    %vm1248 = vcmp.ne.s32.totalorder %v1247, 0
    %vm1249 = vmand %vm1244, %vm1248
    %v1250 = vsel %vm1249, 7, %v1107
    %v1251 = vsub.f32 1.0, %v1224
    %v1252 = vmul.f32 %v1109, %v1251
    %v1253 = vadd.f32 %v1200, %v393
    %v1254 = vmul.f32 %v1220, %v1253
    %v1255 = vadd.f32 %v218, %v1254
    %v1256 = vtanh.pop %v1255
    %v1257 = vsub.f32 1.0, %v1222
    %v1258 = vmul.f32 %v1257, %v1256
    %v1259 = vmul.f32 %v1222, %v1117
    %v1260 = vadd.f32 %v1258, %v1259
    %v1261 = vpack.c.bf16 %v1260, %v1260
    %v1263 = vsel %vm266, %v1261, 0
    %1265 = vmatprep.subr.bf16.mxu0 0
    %1266 = vmatpush1.bf16.msra.mxu0 0
    %1267 = vmatprep.subr.bf16.mxu0 0
    %1268 = vmatpush1.bf16.msra.mxu0 0
    %1269 = vmatprep.subr.bf16.mxu0 0
    %1270 = vmatpush1.bf16.msra.mxu0 0
    %1271 = vmatprep.subr.bf16.mxu0 0
    %1272 = vmatpush1.bf16.msra.mxu0 0
    %1273 = vmatprep.subr.bf16.mxu0 0
    %1274 = vmatpush1.bf16.msra.mxu0 0
    %1275 = vmatprep.subr.bf16.mxu0 0
    %1276 = vmatpush1.bf16.msra.mxu0 0
    %1277 = vmatprep.subr.bf16.mxu0 %v257
    %1278 = vmatpush1.bf16.msra.mxu0 %v256
    %1279 = vmatprep.subr.bf16.mxu0 %v253
    %1280 = vmatpush1.bf16.msra.mxu0 %v252
    %1281 = vmatprep.subr.bf16.mxu0 0
    %1282 = vmatpush2.bf16.msra.mxu0 0
    %1283 = vmatprep.subr.bf16.mxu0 0
    %1284 = vmatpush2.bf16.msra.mxu0 0
    %1285 = vmatprep.subr.bf16.mxu0 0
    %1286 = vmatpush2.bf16.msra.mxu0 0
    %1287 = vmatprep.subr.bf16.mxu0 0
    %1288 = vmatpush2.bf16.msra.mxu0 0
    %1289 = vmatprep.subr.bf16.mxu0 0
    %1290 = vmatpush2.bf16.msra.mxu0 0
    %1291 = vmatprep.subr.bf16.mxu0 0
    %1292 = vmatpush2.bf16.msra.mxu0 0
    %1293 = vmatprep.subr.bf16.mxu0 0
    %1294 = vmatpush2.bf16.msra.mxu0 0
    %1295 = vmatprep.subr.bf16.mxu0 0
    %1296 = vmatpush2.bf16.msra.mxu0 0
    %1297 = vmatprep.mubr.bf16.mxu0 0
    %1298 = vmatmul.mubr.bf16.gmra.mxu0 %v1263
    %v1299 = vpop.f32.mrf.mxu0
    %v1300 = vadd.f32 0.0, %v1299
    %v1301 = vpop.f32.mrf.mxu0
    %v1302 = vpop.f32.mrf.mxu0
    %v1303 = vpop.f32.mrf.mxu0
    %1304 = vdwg.mxu0
    %v1305 = vadd.f32 %v1300, %v216
    %vm1306 = vcmp.eq.s32.totalorder %v225, 7
    %1308 = vset.pattern.permute.xlu0 1
    %1309 = vperm.xlu0 %1308, %v1305
    %v1310 = vpop.permute.xlu0 %1309
    %v1312 = vsel %vm1306, %v1310, %v1231
    %1314 = vset.pattern.permute.xlu0 0
    %1315 = vperm.xlu0 %1314, %v1252
    %v1316 = vpop.permute.xlu0 %1315
    %v1318 = vsel %vm1306, %v1316, %v1238
    %vm1319 = vcmp.eq.s32.totalorder %v1250, 0
    %v1320 = vsel %vm1319, 8, %v1250
    %1321 = vxpose.xlu0.b32.start [1/16] %v1312, 128
    %1322 = vxpose.xlu0.b32.cont [2/16] 0.0, 128
    %1323 = vxpose.xlu0.b32.cont [3/16] 0.0, 128
    %1324 = vxpose.xlu0.b32.cont [4/16] 0.0, 128
    %1325 = vxpose.xlu0.b32.cont [5/16] 0.0, 128
    %1326 = vxpose.xlu0.b32.cont [6/16] 0.0, 128
    %1327 = vxpose.xlu0.b32.cont [7/16] 0.0, 128
    %1328 = vxpose.xlu0.b32.cont [8/16] 0.0, 128
    %1329 = vxpose.xlu0.b32.cont [9/16] 0.0, 128
    %1330 = vxpose.xlu0.b32.cont [10/16] 0.0, 128
    %1331 = vxpose.xlu0.b32.cont [11/16] 0.0, 128
    %1332 = vxpose.xlu0.b32.cont [12/16] 0.0, 128
    %1333 = vxpose.xlu0.b32.cont [13/16] 0.0, 128
    %1334 = vxpose.xlu0.b32.cont [14/16] 0.0, 128
    %1335 = vxpose.xlu0.b32.cont [15/16] 0.0, 128
    %1336 = vxpose.xlu0.b32.end [16/16] 0.0, 128
    %v1337 = vpop.trf.xlu0
    %v1338 = vpop.trf.xlu0
    %v1339 = vpop.trf.xlu0
    %v1340 = vpop.trf.xlu0
    %v1341 = vpop.trf.xlu0
    %v1342 = vpop.trf.xlu0
    %v1343 = vpop.trf.xlu0
    %v1344 = vpop.trf.xlu0
    %v1345 = vpop.trf.xlu0
    %v1346 = vpop.trf.xlu0
    %v1347 = vpop.trf.xlu0
    %v1348 = vpop.trf.xlu0
    %v1349 = vpop.trf.xlu0
    %v1350 = vpop.trf.xlu0
    %v1351 = vpop.trf.xlu0
    %v1352 = vpop.trf.xlu0
    %vm1353 = vcmask 64512
    %1354 = vst.msk [vmem:[#allocation10] sm:$0xff] %vm1353, %v1337
    %1355 = vxpose.xlu0.b32.start [1/16] %v1318, 128
    %1356 = vxpose.xlu0.b32.cont [2/16] 0.0, 128
    %1357 = vxpose.xlu0.b32.cont [3/16] 0.0, 128
    %1358 = vxpose.xlu0.b32.cont [4/16] 0.0, 128
    %1359 = vxpose.xlu0.b32.cont [5/16] 0.0, 128
    %1360 = vxpose.xlu0.b32.cont [6/16] 0.0, 128
    %1361 = vxpose.xlu0.b32.cont [7/16] 0.0, 128
    %1362 = vxpose.xlu0.b32.cont [8/16] 0.0, 128
    %1363 = vxpose.xlu0.b32.cont [9/16] 0.0, 128
    %1364 = vxpose.xlu0.b32.cont [10/16] 0.0, 128
    %1365 = vxpose.xlu0.b32.cont [11/16] 0.0, 128
    %1366 = vxpose.xlu0.b32.cont [12/16] 0.0, 128
    %1367 = vxpose.xlu0.b32.cont [13/16] 0.0, 128
    %1368 = vxpose.xlu0.b32.cont [14/16] 0.0, 128
    %1369 = vxpose.xlu0.b32.cont [15/16] 0.0, 128
    %1370 = vxpose.xlu0.b32.end [16/16] 0.0, 128
    %v1371 = vpop.trf.xlu0
    %v1372 = vpop.trf.xlu0
    %v1373 = vpop.trf.xlu0
    %v1374 = vpop.trf.xlu0
    %v1375 = vpop.trf.xlu0
    %v1376 = vpop.trf.xlu0
    %v1377 = vpop.trf.xlu0
    %v1378 = vpop.trf.xlu0
    %v1379 = vpop.trf.xlu0
    %v1380 = vpop.trf.xlu0
    %v1381 = vpop.trf.xlu0
    %v1382 = vpop.trf.xlu0
    %v1383 = vpop.trf.xlu0
    %v1384 = vpop.trf.xlu0
    %v1385 = vpop.trf.xlu0
    %v1386 = vpop.trf.xlu0
    %1387 = vst.msk [vmem:[#allocation11] sm:$0xff] %vm1353, %v1371
    %vm1388 = vcmask 7168
    %1389 = vst.msk [vmem:[%s8] sm:$0xff] %vm1388, %v1320
    // Predicated region
    $region42: #{tpu_custom_call.1} parent=1 // pred_check
      _
    $region43: #{tpu_custom_call.1} parent=1 // pred_check_branch
      %1391 = sbr.rel (0) target = $region45
    $region44: #{tpu_custom_call.1} parent=1 // pred_region
      %s1393 = ssub.s32 128, 128
      %1394 = vsyncadd [#allocation4], %s1393
      %s1396 = sshll.u32 [#allocation10], 4
      %s1397 = int_to_ptr.vmem [resolvable:$true] %s1396
      %1399 = dma.vmem_to_hbm [thread:$0]  %s1397, 128, %s6, [#allocation4]
    $region45: #{tpu_custom_call.1} parent=1 // pred_fallthru
      _
    // Predicated region
    $region46: #{tpu_custom_call.1} parent=1 // pred_check
      _
    $region47: #{tpu_custom_call.1} parent=1 // pred_check_branch
      %1401 = sbr.rel (0) target = $region49
    $region48: #{tpu_custom_call.1} parent=1 // pred_region
      %s1403 = ssub.s32 128, 128
      %1404 = vsyncadd [#allocation12], %s1403
      %s1406 = sshll.u32 [#allocation11], 4
      %s1407 = int_to_ptr.vmem [resolvable:$true] %s1406
      %1409 = dma.vmem_to_hbm [thread:$0]  %s1407, 128, %s7, [#allocation12]
    $region49: #{tpu_custom_call.1} parent=1 // pred_fallthru
      _
    // Predicated region
    $region50: #{tpu_custom_call.1} parent=1 // pred_check
      _
    $region51: #{tpu_custom_call.1} parent=1 // pred_check_branch
      %1411 = sbr.rel (0) target = $region53
    $region52: #{tpu_custom_call.1} parent=1 // pred_region
      _
    $region53: #{tpu_custom_call.1} parent=1 // pred_fallthru
      _
    // Predicated region
    $region54: #{tpu_custom_call.1} parent=1 // pred_check
      _
    $region55: #{tpu_custom_call.1} parent=1 // pred_check_branch
      %1413 = sbr.rel (0) target = $region57
    $region56: #{tpu_custom_call.1} parent=1 // pred_region
      %1414 = dma.done [#allocation4], 128
    $region57: #{tpu_custom_call.1} parent=1 // pred_fallthru
      _
    // Predicated region
    $region58: #{tpu_custom_call.1} parent=1 // pred_check
      _
    $region59: #{tpu_custom_call.1} parent=1 // pred_check_branch
      %1416 = sbr.rel (0) target = $region61
    $region60: #{tpu_custom_call.1} parent=1 // pred_region
      %1417 = dma.done [#allocation12], 128
    $region61: #{tpu_custom_call.1} parent=1 // pred_fallthru
      _
    // Predicated region
    $region62: #{tpu_custom_call.1} parent=1 // pred_check
      _
    $region63: #{tpu_custom_call.1} parent=1 // pred_check_branch
      %1419 = sbr.rel (0) target = $region65
    $region64: #{tpu_custom_call.1} parent=1 // pred_region
      _
    $region65: #{tpu_custom_call.1} parent=1 // pred_fallthru
      _
    %1420 = vsyncpa [#allocation3], 1
    %1421 = vsyncpa [#allocation6], 1
    %1422 = vsyncpa [#allocation9], 1
    %1423 = vsyncpa [#allocation4], 1
    %1424 = vsyncpa [#allocation12], 1

</llo_original>
